<compile_context>
chip_gen: v7x
topology: tpu7x:2x2x1
jax: 0.10.0
libtpu: 0.0.40
codegen_flags: <defaults>
</compile_context>

<pallas_src>
import functools

import jax
import jax.numpy as jnp
from jax.experimental import pallas as pl
from jax.experimental.pallas import tpu as pltpu

_VMEM_LIMIT = 32 * 1024 * 1024
_LANE = 128


def _round_up(n, m):
    return ((n + m - 1) // m) * m


def _pad_axis(a, new_size, axis):
    pad = [(0, 0)] * a.ndim
    pad[axis] = (0, new_size - a.shape[axis])
    return jnp.pad(a, pad)


def _pad_gates(w, hidden_p):
    """(..., 4*H) -> (..., 4*Hp): zero-pad each of the 4 gate blocks to Hp lanes."""
    parts = [_pad_axis(p, hidden_p, -1) for p in jnp.split(w, 4, axis=-1)]
    return jnp.concatenate(parts, axis=-1)


def _shift_down(y, s):
    """z[t] = y[t - s], zeros for t < s.

    Causal time-shift of a VMEM-resident (T, C) tile: the boundary is handled
    in-kernel (zero rows), so the wrapper never materializes a left-padded
    copy of any activation in HBM.
    """
    if s == 0:
        return y
    zeros = jnp.zeros((s,) + y.shape[1:], y.dtype)
    return jnp.concatenate([zeros, y[: y.shape[0] - s]], axis=0)


# ----------------------------------------------------------------------------
# Single fused kernel: conv1 -> conv2 -> AvgPool -> 2-layer LSTM -> Linear
# (one batch element per grid step; grid axis marked "parallel" for v7x).
# ----------------------------------------------------------------------------
def _crnn_kernel(x_ref, w1_ref, s1_ref, t1_ref, w2_ref, s2_ref, t2_ref,
                 wih0_ref, b0_ref, whh0_ref, w1cat_ref, b1_ref,
                 wfc_ref, bfc_ref, o_ref, xg_ref, *, pool, k2):
    """Entire CRNN forward for one batch element, fully resident in VMEM.

    x_ref:     (1, T, Fin)     f32   raw input slice (no wrapper padding)
    w1_ref:    (K1, Fin, C1p)  bf16  conv1 per-tap weights
    s1/t1:     (1, C1p)        f32   folded inference BN1 scale/shift (+bias)
    w2_ref:    (K2*C1p, C2p)   bf16  conv2 taps folded into the contraction
    s2/t2:     (1, C2p)        f32
    wih0_ref:  (C2p, 4*Hp)     bf16  LSTM layer-0 input projection
    b0_ref:    (1, 4*Hp)       f32   b_ih0 + b_hh0 (gate-padded)
    whh0_ref:  (Hp, 4*Hp)      bf16
    w1cat_ref: (2*Hp, 4*Hp)    bf16  [W_ih1; W_hh1] stacked (one 2*Hp-deep dot)
    b1_ref:    (1, 4*Hp)       f32
    wfc_ref:   (Hp, Op)        bf16
    bfc_ref:   (1, Op)         f32
    o_ref:     (1, 1, Op)      f32
    xg_ref:    (Tp, 4*Hp)      f32   VMEM scratch: time-parallel layer-0 gates
    """
    f32, bf16 = jnp.float32, jnp.bfloat16
    T = x_ref.shape[1]
    k1 = w1_ref.shape[0]
    Hp = whh0_ref.shape[0]
    Tp = T // pool

    # ---- ConvBlock 1: causal conv + folded BN + ReLU ------------------------
    # Cin (num_features) is tiny, so each tap is already a single MXU pass;
    # shifting the (T, C1p) tap *outputs* (shift commutes with the row-wise
    # matmul) keeps every sublane op on full-128-lane tiles.
    xb = x_ref[0].astype(bf16)                                    # (T, Fin)
    acc1 = jnp.zeros((T, w1_ref.shape[2]), f32)
    for k in range(k1):                                           # k1 static, tiny
        tap = jnp.dot(xb, w1_ref[k], preferred_element_type=f32)  # (T, C1p)
        acc1 = acc1 + _shift_down(tap, k1 - 1 - k)
    h1 = jnp.maximum(acc1 * s1_ref[...] + t1_ref[...], 0.0)       # (T, C1p) f32

    # ---- ConvBlock 2: K taps folded into one K2*C1p-deep contraction --------
    # (256-deep == a single native pass on the v6e/v7x 2x256^2 MXU.)
    xs2 = jnp.concatenate([_shift_down(h1, k2 - 1 - k) for k in range(k2)],
                          axis=-1).astype(bf16)                   # (T, K2*C1p)
    h2 = jnp.maximum(
        jnp.dot(xs2, w2_ref[...], preferred_element_type=f32)
        * s2_ref[...] + t2_ref[...], 0.0)                         # (T, C2p) f32

    # ---- AvgPool1d (stride == kernel == pool, floor semantics) --------------
    C2p = h2.shape[-1]
    g = jnp.mean(h2[:Tp * pool].reshape(Tp, pool, C2p), axis=1)   # (Tp, C2p)

    # ---- LSTM layer-0 input projection: time-parallel, off the serial path --
    xg_ref[...] = (jnp.dot(g.astype(bf16), wih0_ref[...],
                           preferred_element_type=f32) + b0_ref[...])

    whh0 = whh0_ref[...]
    w1cat = w1cat_ref[...]
    b1 = b1_ref[...]

    def gate_update(gates, c):
        i = jax.nn.sigmoid(gates[:, 0 * Hp:1 * Hp])
        f = jax.nn.sigmoid(gates[:, 1 * Hp:2 * Hp])
        gg = jnp.tanh(gates[:, 2 * Hp:3 * Hp])
        o = jax.nn.sigmoid(gates[:, 3 * Hp:4 * Hp])
        c_new = f * c + i * gg
        return o * jnp.tanh(c_new), c_new

    def step(t, carry):
        h0, c0, h1s, c1s = carry
        # Layer 0: only the recurrent h @ W_hh matmul is on the serial path.
        g0 = xg_ref[pl.ds(t, 1), :] + jnp.dot(h0.astype(bf16), whh0,
                                              preferred_element_type=f32)
        h0, c0 = gate_update(g0, c0)
        # Layer 1: input + recurrent matmuls fused into one 2*Hp-deep dot.
        hcat = jnp.concatenate([h0, h1s], axis=-1).astype(bf16)   # (1, 2*Hp)
        g1 = jnp.dot(hcat, w1cat, preferred_element_type=f32) + b1
        h1s, c1s = gate_update(g1, c1s)
        return h0, c0, h1s, c1s

    z = jnp.zeros((1, Hp), f32)
    # Bounded unroll: full at Tp=2, capped for longer pooled sequences so the
    # 64-entry vreg file does not spill.
    carry = jax.lax.fori_loop(0, Tp, step, (z, z, z, z), unroll=min(Tp, 8))
    h1_last = carry[2]

    # TODO(synk): nn.Dropout(0.1) is identity in eval mode; training-mode
    # random masking is intentionally not implemented.
    o_ref[0] = (jnp.dot(h1_last.astype(bf16), wfc_ref[...],
                        preferred_element_type=f32) + bfc_ref[...])


def crnn_forward(x, kp):
    """x: (B, T, num_features) -- same as the PyTorch module's batch-first input."""
    B, T, Fin = x.shape
    pool, k1, k2 = kp["pool"], kp["k1"], kp["k2"]
    Tp = T // pool
    C1p = kp["w1p"].shape[2]
    C2p = kp["w2f"].shape[1]
    Hp = kp["whh0p"].shape[0]
    G = 4 * Hp
    Op = kp["wfcp"].shape[1]

    weights = (kp["w1p"], kp["scale1p"], kp["shift1p"], kp["w2f"], kp["scale2p"],
               kp["shift2p"], kp["wih0p"], kp["b0p"], kp["whh0p"], kp["w1catp"],
               kp["b1p"], kp["wfcp"], kp["bfcp"])

    flops = B * (2 * T * k1 * Fin * C1p
                 + 2 * T * (k2 * C1p) * C2p
                 + 2 * Tp * C2p * G
                 + Tp * (2 * Hp * G + 2 * (2 * Hp) * G)
                 + 2 * Hp * Op)
    transcendentals = B * Tp * 2 * 5 * Hp
    bytes_accessed = (x.size * x.dtype.itemsize
                      + sum(int(w.size) * w.dtype.itemsize for w in weights)
                      + B * Op * 4)

    kernel = functools.partial(_crnn_kernel, pool=pool, k2=k2)
    out = pl.pallas_call(
        kernel,
        out_shape=jax.ShapeDtypeStruct((B, 1, Op), jnp.float32),
        grid=(B,),
        in_specs=[
            pl.BlockSpec((1, T, Fin), lambda b: (b, 0, 0)),
            pl.BlockSpec(kp["w1p"].shape, lambda b: (0, 0, 0)),
            pl.BlockSpec(kp["scale1p"].shape, lambda b: (0, 0)),
            pl.BlockSpec(kp["shift1p"].shape, lambda b: (0, 0)),
            pl.BlockSpec(kp["w2f"].shape, lambda b: (0, 0)),
            pl.BlockSpec(kp["scale2p"].shape, lambda b: (0, 0)),
            pl.BlockSpec(kp["shift2p"].shape, lambda b: (0, 0)),
            pl.BlockSpec(kp["wih0p"].shape, lambda b: (0, 0)),
            pl.BlockSpec(kp["b0p"].shape, lambda b: (0, 0)),
            pl.BlockSpec(kp["whh0p"].shape, lambda b: (0, 0)),
            pl.BlockSpec(kp["w1catp"].shape, lambda b: (0, 0)),
            pl.BlockSpec(kp["b1p"].shape, lambda b: (0, 0)),
            pl.BlockSpec(kp["wfcp"].shape, lambda b: (0, 0)),
            pl.BlockSpec(kp["bfcp"].shape, lambda b: (0, 0)),
        ],
        out_specs=pl.BlockSpec((1, 1, Op), lambda b: (b, 0, 0)),
        scratch_shapes=[pltpu.VMEM((Tp, G), jnp.float32)],
        compiler_params=pltpu.CompilerParams(
            dimension_semantics=("parallel",),
            vmem_limit_bytes=_VMEM_LIMIT),
        cost_estimate=pl.CostEstimate(flops=flops,
                                      transcendentals=transcendentals,
                                      bytes_accessed=bytes_accessed),
    )(x, *weights)
    # Only remaining wrapper op: strip the lane padding / dummy dim.
    return out[:, 0, :kp["output_size"]]


# ----------------------------------------------------------------------------
# Parameters
# ----------------------------------------------------------------------------
def init_logical_params(key, num_features, output_size, hidden, k1=2, k2=2,
                        conv1_nf=64, conv2_nf=128, eps=1e-3):
    """Random parameters in a PyTorch-equivalent layout.

    Conv weights: (K, Cin, Cout) with w[k, ci, co] == torch_conv.weight[co, ci, k].
    LSTM weights: (in, 4H), gate order (i, f, g, o) == weight_ih/hh transposed.
    eps=1e-3 matches ConvBlock's explicit epsilon=0.001.
    """
    ks = jax.random.split(key, 22)
    f = lambda k, shape, s=0.1: (s * jax.random.normal(k, shape)).astype(jnp.float32)
    H = hidden
    return dict(
        k1=k1, k2=k2, pool=output_size, eps=eps,
        w1=f(ks[0], (k1, num_features, conv1_nf)), bconv1=f(ks[1], (conv1_nf,)),
        gamma1=1.0 + f(ks[2], (conv1_nf,)), beta1=f(ks[3], (conv1_nf,)),
        mean1=f(ks[4], (conv1_nf,)), var1=1.0 + jnp.abs(f(ks[5], (conv1_nf,))),
        w2=f(ks[6], (k2, conv1_nf, conv2_nf)), bconv2=f(ks[7], (conv2_nf,)),
        gamma2=1.0 + f(ks[8], (conv2_nf,)), beta2=f(ks[9], (conv2_nf,)),
        mean2=f(ks[10], (conv2_nf,)), var2=1.0 + jnp.abs(f(ks[11], (conv2_nf,))),
        wih0=f(ks[12], (conv2_nf, 4 * H)), whh0=f(ks[13], (H, 4 * H)),
        bih0=f(ks[14], (4 * H,)), bhh0=f(ks[15], (4 * H,)),
        wih1=f(ks[16], (H, 4 * H)), whh1=f(ks[17], (H, 4 * H)),
        bih1=f(ks[18], (4 * H,)), bhh1=f(ks[19], (4 * H,)),
        wfc=f(ks[20], (H, output_size)), bfc=f(ks[21], (output_size,)),
    )


def prepare_kernel_params(lp):
    """Fold BN, cast matmul weights to bf16, pad lane dims to 128, fold taps
    into the conv2 contraction, and stack LSTM layer-1 input+recurrent weights."""
    bf16 = jnp.bfloat16
    eps = lp["eps"]
    K1, Fin, C1 = lp["w1"].shape
    K2, _, C2 = lp["w2"].shape
    H = lp["whh0"].shape[0]
    O = lp["wfc"].shape[1]
    C1p, C2p = _round_up(C1, _LANE), _round_up(C2, _LANE)
    Hp, Op = _round_up(H, _LANE), _round_up(O, _LANE)

    def fold_bn(bconv, gamma, beta, mean, var):
        scale = gamma / jnp.sqrt(var + eps)
        shift = beta + scale * (bconv - mean)
        return scale, shift

    s1, t1 = fold_bn(lp["bconv1"], lp["gamma1"], lp["beta1"], lp["mean1"], lp["var1"])
    s2, t2 = fold_bn(lp["bconv2"], lp["gamma2"], lp["beta2"], lp["mean2"], lp["var2"])

    kp = dict(k1=K1, k2=K2, pool=lp["pool"], output_size=O)
    # Conv1: per-tap weights (kernel shifts tap outputs); pad Cout -> C1p
    # (padded channels: scale=shift=0 => ReLU output 0).
    kp["w1p"] = _pad_axis(lp["w1"], C1p, 2).astype(bf16)                # (K1,Fin,C1p)
    kp["scale1p"] = _pad_axis(s1, C1p, 0).reshape(1, C1p)
    kp["shift1p"] = _pad_axis(t1, C1p, 0).reshape(1, C1p)
    # Conv2: pad Cin -> C1p (zero rows) and Cout -> C2p, fold taps into rows.
    w2pad = _pad_axis(_pad_axis(lp["w2"], C1p, 1), C2p, 2)              # (K2,C1p,C2p)
    kp["w2f"] = w2pad.reshape(K2 * C1p, C2p).astype(bf16)
    kp["scale2p"] = _pad_axis(s2, C2p, 0).reshape(1, C2p)
    kp["shift2p"] = _pad_axis(t2, C2p, 0).reshape(1, C2p)
    # LSTM layer 0: per-gate zero-pad H -> Hp (padded lanes provably stay at
    # h=c=0), zero-pad input rows, combine PyTorch's b_ih + b_hh.
    kp["wih0p"] = _pad_axis(_pad_gates(lp["wih0"], Hp), C2p, 0).astype(bf16)
    kp["b0p"] = _pad_gates(lp["bih0"] + lp["bhh0"], Hp).reshape(1, 4 * Hp)
    kp["whh0p"] = _pad_axis(_pad_gates(lp["whh0"], Hp), Hp, 0).astype(bf16)
    # LSTM layer 1: stack input + recurrent weights -> one 2*Hp-deep matmul.
    wih1p = _pad_axis(_pad_gates(lp["wih1"], Hp), Hp, 0)
    whh1p = _pad_axis(_pad_gates(lp["whh1"], Hp), Hp, 0)
    kp["w1catp"] = jnp.concatenate([wih1p, whh1p], axis=0).astype(bf16)  # (2Hp,4Hp)
    kp["b1p"] = _pad_gates(lp["bih1"] + lp["bhh1"], Hp).reshape(1, 4 * Hp)
    # FC: pad rows H -> Hp and output O -> Op (dense 128-lane store).
    kp["wfcp"] = _pad_axis(_pad_axis(lp["wfc"], Hp, 0), Op, 1).astype(bf16)
    kp["bfcp"] = _pad_axis(lp["bfc"], Op, 0).reshape(1, Op)
    return kp


# ----------------------------------------------------------------------------
# Pure-JAX reference (mirrors the kernel math: bf16 MXU operands, f32 accumulate)
# ----------------------------------------------------------------------------
def ref_forward(x, lp):
    bf16, f32 = jnp.bfloat16, jnp.float32
    B, T, _ = x.shape
    eps = lp["eps"]

    def convblock(h, w, bconv, gamma, beta, mean, var):
        K = w.shape[0]
        hp = jnp.pad(h, ((0, 0), (K - 1, 0), (0, 0)))
        wb = w.astype(bf16)
        acc = jnp.zeros((B, T, w.shape[2]), f32)
        for k in range(K):
            xs = hp[:, k:k + T].astype(bf16)
            acc = acc + jnp.einsum("btc,co->bto", xs, wb[k],
                                   preferred_element_type=f32)
        scale = gamma / jnp.sqrt(var + eps)
        shift = beta + scale * (bconv - mean)
        return jnp.maximum(acc * scale + shift, 0.0)

    h = convblock(x, lp["w1"], lp["bconv1"], lp["gamma1"], lp["beta1"],
                  lp["mean1"], lp["var1"])
    h = convblock(h, lp["w2"], lp["bconv2"], lp["gamma2"], lp["beta2"],
                  lp["mean2"], lp["var2"])

    pool = lp["pool"]
    Tp = T // pool
    g = h[:, :Tp * pool].reshape(B, Tp, pool, -1).mean(axis=2)

    H = lp["whh0"].shape[0]
    b0 = lp["bih0"] + lp["bhh0"]
    b1 = lp["bih1"] + lp["bhh1"]

    def cell(x_side, hh, cc, whh):
        gates = x_side + jnp.dot(hh.astype(bf16), whh.astype(bf16),
                                 preferred_element_type=f32)
        i, f, gg, o = jnp.split(gates, 4, axis=-1)
        cc = jax.nn.sigmoid(f) * cc + jax.nn.sigmoid(i) * jnp.tanh(gg)
        hh = jax.nn.sigmoid(o) * jnp.tanh(cc)
        return hh, cc

    h0 = c0 = h1 = c1 = jnp.zeros((B, H), f32)
    for t in range(Tp):
        x0 = jnp.dot(g[:, t].astype(bf16), lp["wih0"].astype(bf16),
                     preferred_element_type=f32) + b0
        h0, c0 = cell(x0, h0, c0, lp["whh0"])
        x1 = jnp.dot(h0.astype(bf16), lp["wih1"].astype(bf16),
                     preferred_element_type=f32) + b1
        h1, c1 = cell(x1, h1, c1, lp["whh1"])
    return jnp.dot(h1.astype(bf16), lp["wfc"].astype(bf16),
                   preferred_element_type=f32) + lp["bfc"]


if __name__ == "__main__":
    # Shapes implied by the module: batch=2, seq_len=16, num_features=4,
    # output_size=8 (also the AvgPool kernel size), hidden_size=32.
    B, T, F = 2, 16, 4
    OUTPUT_SIZE, HIDDEN = 8, 32

    key = jax.random.PRNGKey(0)
    kx, kparam = jax.random.split(key)
    x = jax.random.normal(kx, (B, T, F), dtype=jnp.float32)

    lp = init_logical_params(kparam, F, OUTPUT_SIZE, HIDDEN)
    kp = prepare_kernel_params(lp)

    out = jax.block_until_ready(crnn_forward(x, kp))
    ref = jax.block_until_ready(ref_forward(x, lp))

    assert out.shape == (B, OUTPUT_SIZE), out.shape
    assert jnp.allclose(out, ref, atol=1e-3, rtol=1e-3), (out, ref)
    print("KERNEL_OK")
</pallas_src>

<mosaic_0001>
module attributes {stable_mosaic.version = 11 : i64} {
  func.func @_crnn_kernel(%arg0: i32, %arg1: memref<1x16x4xf32, #tpu.memory_space<vmem>>, %arg2: memref<2x4x128xbf16, #tpu.memory_space<vmem>>, %arg3: memref<1x128xf32, #tpu.memory_space<vmem>>, %arg4: memref<1x128xf32, #tpu.memory_space<vmem>>, %arg5: memref<256x128xbf16, #tpu.memory_space<vmem>>, %arg6: memref<1x128xf32, #tpu.memory_space<vmem>>, %arg7: memref<1x128xf32, #tpu.memory_space<vmem>>, %arg8: memref<128x512xbf16, #tpu.memory_space<vmem>>, %arg9: memref<1x512xf32, #tpu.memory_space<vmem>>, %arg10: memref<128x512xbf16, #tpu.memory_space<vmem>>, %arg11: memref<256x512xbf16, #tpu.memory_space<vmem>>, %arg12: memref<1x512xf32, #tpu.memory_space<vmem>>, %arg13: memref<128x128xbf16, #tpu.memory_space<vmem>>, %arg14: memref<1x128xf32, #tpu.memory_space<vmem>>, %arg15: memref<1x1x128xf32, #tpu.memory_space<vmem>>, %arg16: memref<2x512xf32, #tpu.memory_space<vmem>>) attributes {dimension_semantics = [#tpu.dimension_semantics<parallel>], iteration_bounds = array<i64: 2>, scalar_prefetch = 0 : i64, scratch_operands = 1 : i64, tpu.core_type = #tpu.core_type<tc>, window_params = [{transform_indices = @transform_0, window_bounds = array<i64: 1, 16, 4>}, {pipeline_mode = #tpu.pipeline_mode<synchronous>, transform_indices = @transform_1, window_bounds = array<i64: 2, 4, 128>}, {pipeline_mode = #tpu.pipeline_mode<synchronous>, transform_indices = @transform_2, window_bounds = array<i64: 1, 128>}, {pipeline_mode = #tpu.pipeline_mode<synchronous>, transform_indices = @transform_3, window_bounds = array<i64: 1, 128>}, {pipeline_mode = #tpu.pipeline_mode<synchronous>, transform_indices = @transform_4, window_bounds = array<i64: 256, 128>}, {pipeline_mode = #tpu.pipeline_mode<synchronous>, transform_indices = @transform_5, window_bounds = array<i64: 1, 128>}, {pipeline_mode = #tpu.pipeline_mode<synchronous>, transform_indices = @transform_6, window_bounds = array<i64: 1, 128>}, {pipeline_mode = #tpu.pipeline_mode<synchronous>, transform_indices = @transform_7, window_bounds = array<i64: 128, 512>}, {pipeline_mode = #tpu.pipeline_mode<synchronous>, transform_indices = @transform_8, window_bounds = array<i64: 1, 512>}, {pipeline_mode = #tpu.pipeline_mode<synchronous>, transform_indices = @transform_9, window_bounds = array<i64: 128, 512>}, {pipeline_mode = #tpu.pipeline_mode<synchronous>, transform_indices = @transform_10, window_bounds = array<i64: 256, 512>}, {pipeline_mode = #tpu.pipeline_mode<synchronous>, transform_indices = @transform_11, window_bounds = array<i64: 1, 512>}, {pipeline_mode = #tpu.pipeline_mode<synchronous>, transform_indices = @transform_12, window_bounds = array<i64: 128, 128>}, {pipeline_mode = #tpu.pipeline_mode<synchronous>, transform_indices = @transform_13, window_bounds = array<i64: 1, 128>}, {transform_indices = @transform_14, window_bounds = array<i64: 1, 1, 128>}]} {
    %c0 = arith.constant 0 : index
    %c0_0 = arith.constant 0 : index
    %c0_1 = arith.constant 0 : index
    %0 = vector.load %arg1[%c0, %c0_0, %c0_1] : memref<1x16x4xf32, #tpu.memory_space<vmem>>, vector<1x16x4xf32>
    %1 = vector.shape_cast %0 : vector<1x16x4xf32> to vector<16x4xf32>
    %2 = arith.truncf %1 : vector<16x4xf32> to vector<16x4xbf16>
    %cst = arith.constant 0.000000e+00 : f32
    %3 = vector.broadcast %cst : f32 to vector<16x128xf32>
    %c0_2 = arith.constant 0 : index
    %c0_3 = arith.constant 0 : index
    %c0_4 = arith.constant 0 : index
    %4 = vector.load %arg2[%c0_2, %c0_3, %c0_4] : memref<2x4x128xbf16, #tpu.memory_space<vmem>>, vector<1x4x128xbf16>
    %5 = vector.shape_cast %4 : vector<1x4x128xbf16> to vector<4x128xbf16>
    %cst_5 = arith.constant dense<0.000000e+00> : vector<16x128xf32>
    %6 = tpu.matmul %2, %5, %cst_5 {dimension_numbers = #tpu.dot_dimension_numbers<[1], [0], [0], [1], [0, 0, 1, 1], [], []>} : vector<16x4xbf16>, vector<4x128xbf16>, vector<16x128xf32> -> vector<16x128xf32>
    %cst_6 = arith.constant 0.000000e+00 : f32
    %7 = vector.broadcast %cst_6 : f32 to vector<1x128xf32>
    %8 = vector.extract_strided_slice %6 {offsets = [0, 0], sizes = [15, 128], strides = [1, 1]} : vector<16x128xf32> to vector<15x128xf32>
    %9 = tpu.concatenate %7, %8 in 0 : vector<1x128xf32>, vector<15x128xf32> -> vector<16x128xf32>
    %10 = arith.addf %3, %9 : vector<16x128xf32>
    %c1 = arith.constant 1 : index
    %c0_7 = arith.constant 0 : index
    %c0_8 = arith.constant 0 : index
    %11 = vector.load %arg2[%c1, %c0_7, %c0_8] : memref<2x4x128xbf16, #tpu.memory_space<vmem>>, vector<1x4x128xbf16>
    %12 = vector.shape_cast %11 : vector<1x4x128xbf16> to vector<4x128xbf16>
    %cst_9 = arith.constant dense<0.000000e+00> : vector<16x128xf32>
    %13 = tpu.matmul %2, %12, %cst_9 {dimension_numbers = #tpu.dot_dimension_numbers<[1], [0], [0], [1], [0, 0, 1, 1], [], []>} : vector<16x4xbf16>, vector<4x128xbf16>, vector<16x128xf32> -> vector<16x128xf32>
    %14 = arith.addf %10, %13 : vector<16x128xf32>
    %c0_10 = arith.constant 0 : index
    %c0_11 = arith.constant 0 : index
    %15 = vector.load %arg3[%c0_10, %c0_11] : memref<1x128xf32, #tpu.memory_space<vmem>>, vector<1x128xf32>
    %16 = vector.broadcast %15 : vector<1x128xf32> to vector<16x128xf32>
    %17 = arith.mulf %14, %16 : vector<16x128xf32>
    %c0_12 = arith.constant 0 : index
    %c0_13 = arith.constant 0 : index
    %18 = vector.load %arg4[%c0_12, %c0_13] : memref<1x128xf32, #tpu.memory_space<vmem>>, vector<1x128xf32>
    %19 = vector.broadcast %18 : vector<1x128xf32> to vector<16x128xf32>
    %20 = arith.addf %17, %19 : vector<16x128xf32>
    %cst_14 = arith.constant 0.000000e+00 : f32
    %21 = vector.broadcast %cst_14 : f32 to vector<16x128xf32>
    %22 = arith.maximumf %20, %21 : vector<16x128xf32>
    %cst_15 = arith.constant 0.000000e+00 : f32
    %23 = vector.broadcast %cst_15 : f32 to vector<1x128xf32>
    %24 = vector.extract_strided_slice %22 {offsets = [0, 0], sizes = [15, 128], strides = [1, 1]} : vector<16x128xf32> to vector<15x128xf32>
    %25 = tpu.concatenate %23, %24 in 0 : vector<1x128xf32>, vector<15x128xf32> -> vector<16x128xf32>
    %26 = tpu.concatenate %25, %22 in 1 : vector<16x128xf32>, vector<16x128xf32> -> vector<16x256xf32>
    %27 = arith.truncf %26 : vector<16x256xf32> to vector<16x256xbf16>
    %c0_16 = arith.constant 0 : index
    %c0_17 = arith.constant 0 : index
    %28 = vector.load %arg5[%c0_16, %c0_17] : memref<256x128xbf16, #tpu.memory_space<vmem>>, vector<256x128xbf16>
    %cst_18 = arith.constant dense<0.000000e+00> : vector<16x128xf32>
    %29 = tpu.matmul %27, %28, %cst_18 {dimension_numbers = #tpu.dot_dimension_numbers<[1], [0], [0], [1], [0, 0, 1, 1], [], []>} : vector<16x256xbf16>, vector<256x128xbf16>, vector<16x128xf32> -> vector<16x128xf32>
    %c0_19 = arith.constant 0 : index
    %c0_20 = arith.constant 0 : index
    %30 = vector.load %arg6[%c0_19, %c0_20] : memref<1x128xf32, #tpu.memory_space<vmem>>, vector<1x128xf32>
    %31 = vector.broadcast %30 : vector<1x128xf32> to vector<16x128xf32>
    %32 = arith.mulf %29, %31 : vector<16x128xf32>
    %c0_21 = arith.constant 0 : index
    %c0_22 = arith.constant 0 : index
    %33 = vector.load %arg7[%c0_21, %c0_22] : memref<1x128xf32, #tpu.memory_space<vmem>>, vector<1x128xf32>
    %34 = vector.broadcast %33 : vector<1x128xf32> to vector<16x128xf32>
    %35 = arith.addf %32, %34 : vector<16x128xf32>
    %cst_23 = arith.constant 0.000000e+00 : f32
    %36 = vector.broadcast %cst_23 : f32 to vector<16x128xf32>
    %37 = arith.maximumf %35, %36 : vector<16x128xf32>
    %38 = vector.shape_cast %37 : vector<16x128xf32> to vector<2x8x128xf32>
    %cst_24 = arith.constant dense<0.000000e+00> : vector<2x128xf32>
    %39 = vector.multi_reduction <add>, %38, %cst_24 [1] : vector<2x8x128xf32> to vector<2x128xf32>
    %cst_25 = arith.constant 8.000000e+00 : f32
    %40 = vector.broadcast %cst_25 : f32 to vector<2x128xf32>
    %41 = arith.divf %39, %40 : vector<2x128xf32>
    %42 = arith.truncf %41 : vector<2x128xf32> to vector<2x128xbf16>
    %c0_26 = arith.constant 0 : index
    %c0_27 = arith.constant 0 : index
    %43 = vector.load %arg8[%c0_26, %c0_27] : memref<128x512xbf16, #tpu.memory_space<vmem>>, vector<128x512xbf16>
    %cst_28 = arith.constant dense<0.000000e+00> : vector<2x512xf32>
    %44 = tpu.matmul %42, %43, %cst_28 {dimension_numbers = #tpu.dot_dimension_numbers<[1], [0], [0], [1], [0, 0, 1, 1], [], []>} : vector<2x128xbf16>, vector<128x512xbf16>, vector<2x512xf32> -> vector<2x512xf32>
    %c0_29 = arith.constant 0 : index
    %c0_30 = arith.constant 0 : index
    %45 = vector.load %arg9[%c0_29, %c0_30] : memref<1x512xf32, #tpu.memory_space<vmem>>, vector<1x512xf32>
    %46 = vector.broadcast %45 : vector<1x512xf32> to vector<2x512xf32>
    %47 = arith.addf %44, %46 : vector<2x512xf32>
    %c0_31 = arith.constant 0 : index
    %c0_32 = arith.constant 0 : index
    %48 = vector.load %arg16[%c0_31, %c0_32] : memref<2x512xf32, #tpu.memory_space<vmem>>, vector<2x512xf32>
    tpu.vector_store %arg16[%c0_31, %c0_32], %47 {strides = array<i32>} : memref<2x512xf32, #tpu.memory_space<vmem>>, vector<2x512xf32>,
    %c0_33 = arith.constant 0 : index
    %c0_34 = arith.constant 0 : index
    %49 = vector.load %arg10[%c0_33, %c0_34] : memref<128x512xbf16, #tpu.memory_space<vmem>>, vector<128x512xbf16>
    %c0_35 = arith.constant 0 : index
    %c0_36 = arith.constant 0 : index
    %50 = vector.load %arg11[%c0_35, %c0_36] : memref<256x512xbf16, #tpu.memory_space<vmem>>, vector<256x512xbf16>
    %c0_37 = arith.constant 0 : index
    %c0_38 = arith.constant 0 : index
    %51 = vector.load %arg12[%c0_37, %c0_38] : memref<1x512xf32, #tpu.memory_space<vmem>>, vector<1x512xf32>
    %cst_39 = arith.constant 0.000000e+00 : f32
    %52 = vector.broadcast %cst_39 : f32 to vector<1x128xf32>
    %c0_i32 = arith.constant 0 : i32
    %53 = arith.index_cast %c0_i32 : i32 to index
    %c0_40 = arith.constant 0 : index
    %54 = vector.load %arg16[%53, %c0_40] : memref<2x512xf32, #tpu.memory_space<vmem>>, vector<1x512xf32>
    %55 = arith.truncf %52 : vector<1x128xf32> to vector<1x128xbf16>
    %cst_41 = arith.constant dense<0.000000e+00> : vector<1x512xf32>
    %56 = tpu.matmul %55, %49, %cst_41 {dimension_numbers = #tpu.dot_dimension_numbers<[1], [0], [0], [1], [0, 0, 1, 1], [], []>} : vector<1x128xbf16>, vector<128x512xbf16>, vector<1x512xf32> -> vector<1x512xf32>
    %57 = arith.addf %54, %56 : vector<1x512xf32>
    %58 = vector.extract_strided_slice %57 {offsets = [0, 0], sizes = [1, 128], strides = [1, 1]} : vector<1x512xf32> to vector<1x128xf32>
    %59 = arith.negf %58 : vector<1x128xf32>
    %60 = math.exp %59 : vector<1x128xf32>
    %cst_42 = arith.constant 1.000000e+00 : f32
    %61 = vector.broadcast %cst_42 : f32 to vector<1x128xf32>
    %62 = arith.addf %61, %60 : vector<1x128xf32>
    %63 = arith.divf %61, %62 : vector<1x128xf32>
    %64 = vector.extract_strided_slice %57 {offsets = [0, 128], sizes = [1, 128], strides = [1, 1]} : vector<1x512xf32> to vector<1x128xf32>
    %65 = arith.negf %64 : vector<1x128xf32>
    %66 = math.exp %65 : vector<1x128xf32>
    %cst_43 = arith.constant 1.000000e+00 : f32
    %67 = vector.broadcast %cst_43 : f32 to vector<1x128xf32>
    %68 = arith.addf %67, %66 : vector<1x128xf32>
    %69 = arith.divf %67, %68 : vector<1x128xf32>
    %70 = vector.extract_strided_slice %57 {offsets = [0, 256], sizes = [1, 128], strides = [1, 1]} : vector<1x512xf32> to vector<1x128xf32>
    %71 = math.tanh %70 : vector<1x128xf32>
    %72 = vector.extract_strided_slice %57 {offsets = [0, 384], sizes = [1, 128], strides = [1, 1]} : vector<1x512xf32> to vector<1x128xf32>
    %73 = arith.negf %72 : vector<1x128xf32>
    %74 = math.exp %73 : vector<1x128xf32>
    %cst_44 = arith.constant 1.000000e+00 : f32
    %75 = vector.broadcast %cst_44 : f32 to vector<1x128xf32>
    %76 = arith.addf %75, %74 : vector<1x128xf32>
    %77 = arith.divf %75, %76 : vector<1x128xf32>
    %78 = arith.mulf %69, %52 : vector<1x128xf32>
    %79 = arith.mulf %63, %71 : vector<1x128xf32>
    %80 = arith.addf %78, %79 : vector<1x128xf32>
    %81 = math.tanh %80 : vector<1x128xf32>
    %82 = arith.mulf %77, %81 : vector<1x128xf32>
    %83 = tpu.concatenate %82, %52 in 1 : vector<1x128xf32>, vector<1x128xf32> -> vector<1x256xf32>
    %84 = arith.truncf %83 : vector<1x256xf32> to vector<1x256xbf16>
    %cst_45 = arith.constant dense<0.000000e+00> : vector<1x512xf32>
    %85 = tpu.matmul %84, %50, %cst_45 {dimension_numbers = #tpu.dot_dimension_numbers<[1], [0], [0], [1], [0, 0, 1, 1], [], []>} : vector<1x256xbf16>, vector<256x512xbf16>, vector<1x512xf32> -> vector<1x512xf32>
    %86 = arith.addf %85, %51 : vector<1x512xf32>
    %87 = vector.extract_strided_slice %86 {offsets = [0, 0], sizes = [1, 128], strides = [1, 1]} : vector<1x512xf32> to vector<1x128xf32>
    %88 = arith.negf %87 : vector<1x128xf32>
    %89 = math.exp %88 : vector<1x128xf32>
    %cst_46 = arith.constant 1.000000e+00 : f32
    %90 = vector.broadcast %cst_46 : f32 to vector<1x128xf32>
    %91 = arith.addf %90, %89 : vector<1x128xf32>
    %92 = arith.divf %90, %91 : vector<1x128xf32>
    %93 = vector.extract_strided_slice %86 {offsets = [0, 128], sizes = [1, 128], strides = [1, 1]} : vector<1x512xf32> to vector<1x128xf32>
    %94 = arith.negf %93 : vector<1x128xf32>
    %95 = math.exp %94 : vector<1x128xf32>
    %cst_47 = arith.constant 1.000000e+00 : f32
    %96 = vector.broadcast %cst_47 : f32 to vector<1x128xf32>
    %97 = arith.addf %96, %95 : vector<1x128xf32>
    %98 = arith.divf %96, %97 : vector<1x128xf32>
    %99 = vector.extract_strided_slice %86 {offsets = [0, 256], sizes = [1, 128], strides = [1, 1]} : vector<1x512xf32> to vector<1x128xf32>
    %100 = math.tanh %99 : vector<1x128xf32>
    %101 = vector.extract_strided_slice %86 {offsets = [0, 384], sizes = [1, 128], strides = [1, 1]} : vector<1x512xf32> to vector<1x128xf32>
    %102 = arith.negf %101 : vector<1x128xf32>
    %103 = math.exp %102 : vector<1x128xf32>
    %cst_48 = arith.constant 1.000000e+00 : f32
    %104 = vector.broadcast %cst_48 : f32 to vector<1x128xf32>
    %105 = arith.addf %104, %103 : vector<1x128xf32>
    %106 = arith.divf %104, %105 : vector<1x128xf32>
    %107 = arith.mulf %98, %52 : vector<1x128xf32>
    %108 = arith.mulf %92, %100 : vector<1x128xf32>
    %109 = arith.addf %107, %108 : vector<1x128xf32>
    %110 = math.tanh %109 : vector<1x128xf32>
    %111 = arith.mulf %106, %110 : vector<1x128xf32>
    %c1_i32 = arith.constant 1 : i32
    %112 = arith.index_cast %c1_i32 : i32 to index
    %c0_49 = arith.constant 0 : index
    %113 = vector.load %arg16[%112, %c0_49] : memref<2x512xf32, #tpu.memory_space<vmem>>, vector<1x512xf32>
    %114 = arith.truncf %82 : vector<1x128xf32> to vector<1x128xbf16>
    %cst_50 = arith.constant dense<0.000000e+00> : vector<1x512xf32>
    %115 = tpu.matmul %114, %49, %cst_50 {dimension_numbers = #tpu.dot_dimension_numbers<[1], [0], [0], [1], [0, 0, 1, 1], [], []>} : vector<1x128xbf16>, vector<128x512xbf16>, vector<1x512xf32> -> vector<1x512xf32>
    %116 = arith.addf %113, %115 : vector<1x512xf32>
    %117 = vector.extract_strided_slice %116 {offsets = [0, 0], sizes = [1, 128], strides = [1, 1]} : vector<1x512xf32> to vector<1x128xf32>
    %118 = arith.negf %117 : vector<1x128xf32>
    %119 = math.exp %118 : vector<1x128xf32>
    %cst_51 = arith.constant 1.000000e+00 : f32
    %120 = vector.broadcast %cst_51 : f32 to vector<1x128xf32>
    %121 = arith.addf %120, %119 : vector<1x128xf32>
    %122 = arith.divf %120, %121 : vector<1x128xf32>
    %123 = vector.extract_strided_slice %116 {offsets = [0, 128], sizes = [1, 128], strides = [1, 1]} : vector<1x512xf32> to vector<1x128xf32>
    %124 = arith.negf %123 : vector<1x128xf32>
    %125 = math.exp %124 : vector<1x128xf32>
    %cst_52 = arith.constant 1.000000e+00 : f32
    %126 = vector.broadcast %cst_52 : f32 to vector<1x128xf32>
    %127 = arith.addf %126, %125 : vector<1x128xf32>
    %128 = arith.divf %126, %127 : vector<1x128xf32>
    %129 = vector.extract_strided_slice %116 {offsets = [0, 256], sizes = [1, 128], strides = [1, 1]} : vector<1x512xf32> to vector<1x128xf32>
    %130 = math.tanh %129 : vector<1x128xf32>
    %131 = vector.extract_strided_slice %116 {offsets = [0, 384], sizes = [1, 128], strides = [1, 1]} : vector<1x512xf32> to vector<1x128xf32>
    %132 = arith.negf %131 : vector<1x128xf32>
    %133 = math.exp %132 : vector<1x128xf32>
    %cst_53 = arith.constant 1.000000e+00 : f32
    %134 = vector.broadcast %cst_53 : f32 to vector<1x128xf32>
    %135 = arith.addf %134, %133 : vector<1x128xf32>
    %136 = arith.divf %134, %135 : vector<1x128xf32>
    %137 = arith.mulf %128, %80 : vector<1x128xf32>
    %138 = arith.mulf %122, %130 : vector<1x128xf32>
    %139 = arith.addf %137, %138 : vector<1x128xf32>
    %140 = math.tanh %139 : vector<1x128xf32>
    %141 = arith.mulf %136, %140 : vector<1x128xf32>
    %142 = tpu.concatenate %141, %111 in 1 : vector<1x128xf32>, vector<1x128xf32> -> vector<1x256xf32>
    %143 = arith.truncf %142 : vector<1x256xf32> to vector<1x256xbf16>
    %cst_54 = arith.constant dense<0.000000e+00> : vector<1x512xf32>
    %144 = tpu.matmul %143, %50, %cst_54 {dimension_numbers = #tpu.dot_dimension_numbers<[1], [0], [0], [1], [0, 0, 1, 1], [], []>} : vector<1x256xbf16>, vector<256x512xbf16>, vector<1x512xf32> -> vector<1x512xf32>
    %145 = arith.addf %144, %51 : vector<1x512xf32>
    %146 = vector.extract_strided_slice %145 {offsets = [0, 0], sizes = [1, 128], strides = [1, 1]} : vector<1x512xf32> to vector<1x128xf32>
    %147 = arith.negf %146 : vector<1x128xf32>
    %148 = math.exp %147 : vector<1x128xf32>
    %cst_55 = arith.constant 1.000000e+00 : f32
    %149 = vector.broadcast %cst_55 : f32 to vector<1x128xf32>
    %150 = arith.addf %149, %148 : vector<1x128xf32>
    %151 = arith.divf %149, %150 : vector<1x128xf32>
    %152 = vector.extract_strided_slice %145 {offsets = [0, 128], sizes = [1, 128], strides = [1, 1]} : vector<1x512xf32> to vector<1x128xf32>
    %153 = arith.negf %152 : vector<1x128xf32>
    %154 = math.exp %153 : vector<1x128xf32>
    %cst_56 = arith.constant 1.000000e+00 : f32
    %155 = vector.broadcast %cst_56 : f32 to vector<1x128xf32>
    %156 = arith.addf %155, %154 : vector<1x128xf32>
    %157 = arith.divf %155, %156 : vector<1x128xf32>
    %158 = vector.extract_strided_slice %145 {offsets = [0, 256], sizes = [1, 128], strides = [1, 1]} : vector<1x512xf32> to vector<1x128xf32>
    %159 = math.tanh %158 : vector<1x128xf32>
    %160 = vector.extract_strided_slice %145 {offsets = [0, 384], sizes = [1, 128], strides = [1, 1]} : vector<1x512xf32> to vector<1x128xf32>
    %161 = arith.negf %160 : vector<1x128xf32>
    %162 = math.exp %161 : vector<1x128xf32>
    %cst_57 = arith.constant 1.000000e+00 : f32
    %163 = vector.broadcast %cst_57 : f32 to vector<1x128xf32>
    %164 = arith.addf %163, %162 : vector<1x128xf32>
    %165 = arith.divf %163, %164 : vector<1x128xf32>
    %166 = arith.mulf %157, %109 : vector<1x128xf32>
    %167 = arith.mulf %151, %159 : vector<1x128xf32>
    %168 = arith.addf %166, %167 : vector<1x128xf32>
    %169 = math.tanh %168 : vector<1x128xf32>
    %170 = arith.mulf %165, %169 : vector<1x128xf32>
    %c2_i32 = arith.constant 2 : i32
    %171 = arith.truncf %170 : vector<1x128xf32> to vector<1x128xbf16>
    %c0_58 = arith.constant 0 : index
    %c0_59 = arith.constant 0 : index
    %172 = vector.load %arg13[%c0_58, %c0_59] : memref<128x128xbf16, #tpu.memory_space<vmem>>, vector<128x128xbf16>
    %cst_60 = arith.constant dense<0.000000e+00> : vector<1x128xf32>
    %173 = tpu.matmul %171, %172, %cst_60 {dimension_numbers = #tpu.dot_dimension_numbers<[1], [0], [0], [1], [0, 0, 1, 1], [], []>} : vector<1x128xbf16>, vector<128x128xbf16>, vector<1x128xf32> -> vector<1x128xf32>
    %c0_61 = arith.constant 0 : index
    %c0_62 = arith.constant 0 : index
    %174 = vector.load %arg14[%c0_61, %c0_62] : memref<1x128xf32, #tpu.memory_space<vmem>>, vector<1x128xf32>
    %175 = arith.addf %173, %174 : vector<1x128xf32>
    %c0_63 = arith.constant 0 : index
    %c0_64 = arith.constant 0 : index
    %c0_65 = arith.constant 0 : index
    %176 = vector.load %arg15[%c0_63, %c0_64, %c0_65] : memref<1x1x128xf32, #tpu.memory_space<vmem>>, vector<1x1x128xf32>
    %177 = vector.shape_cast %176 : vector<1x1x128xf32> to vector<1x128xf32>
    %178 = vector.shape_cast %175 : vector<1x128xf32> to vector<1x1x128xf32>
    tpu.vector_store %arg15[%c0_63, %c0_64, %c0_65], %178 {strides = array<i32>} : memref<1x1x128xf32, #tpu.memory_space<vmem>>, vector<1x1x128xf32>,
    return
  }
  func.func @transform_0(%arg0: i32) -> (i32, i32, i32) {
    %c0_i32 = arith.constant 0 : i32
    %c0_i32_0 = arith.constant 0 : i32
    %c0_i32_1 = arith.constant 0 : i32
    return %arg0, %c0_i32, %c0_i32_0 : i32, i32, i32
  }
  func.func @transform_1(%arg0: i32) -> (i32, i32, i32) {
    %c0_i32 = arith.constant 0 : i32
    %c0_i32_0 = arith.constant 0 : i32
    %c0_i32_1 = arith.constant 0 : i32
    %c0_i32_2 = arith.constant 0 : i32
    return %c0_i32, %c0_i32_0, %c0_i32_1 : i32, i32, i32
  }
  func.func @transform_2(%arg0: i32) -> (i32, i32) {
    %c0_i32 = arith.constant 0 : i32
    %c0_i32_0 = arith.constant 0 : i32
    %c0_i32_1 = arith.constant 0 : i32
    return %c0_i32, %c0_i32_0 : i32, i32
  }
  func.func @transform_3(%arg0: i32) -> (i32, i32) {
    %c0_i32 = arith.constant 0 : i32
    %c0_i32_0 = arith.constant 0 : i32
    %c0_i32_1 = arith.constant 0 : i32
    return %c0_i32, %c0_i32_0 : i32, i32
  }
  func.func @transform_4(%arg0: i32) -> (i32, i32) {
    %c0_i32 = arith.constant 0 : i32
    %c0_i32_0 = arith.constant 0 : i32
    %c0_i32_1 = arith.constant 0 : i32
    return %c0_i32, %c0_i32_0 : i32, i32
  }
  func.func @transform_5(%arg0: i32) -> (i32, i32) {
    %c0_i32 = arith.constant 0 : i32
    %c0_i32_0 = arith.constant 0 : i32
    %c0_i32_1 = arith.constant 0 : i32
    return %c0_i32, %c0_i32_0 : i32, i32
  }
  func.func @transform_6(%arg0: i32) -> (i32, i32) {
    %c0_i32 = arith.constant 0 : i32
    %c0_i32_0 = arith.constant 0 : i32
    %c0_i32_1 = arith.constant 0 : i32
    return %c0_i32, %c0_i32_0 : i32, i32
  }
  func.func @transform_7(%arg0: i32) -> (i32, i32) {
    %c0_i32 = arith.constant 0 : i32
    %c0_i32_0 = arith.constant 0 : i32
    %c0_i32_1 = arith.constant 0 : i32
    return %c0_i32, %c0_i32_0 : i32, i32
  }
  func.func @transform_8(%arg0: i32) -> (i32, i32) {
    %c0_i32 = arith.constant 0 : i32
    %c0_i32_0 = arith.constant 0 : i32
    %c0_i32_1 = arith.constant 0 : i32
    return %c0_i32, %c0_i32_0 : i32, i32
  }
  func.func @transform_9(%arg0: i32) -> (i32, i32) {
    %c0_i32 = arith.constant 0 : i32
    %c0_i32_0 = arith.constant 0 : i32
    %c0_i32_1 = arith.constant 0 : i32
    return %c0_i32, %c0_i32_0 : i32, i32
  }
  func.func @transform_10(%arg0: i32) -> (i32, i32) {
    %c0_i32 = arith.constant 0 : i32
    %c0_i32_0 = arith.constant 0 : i32
    %c0_i32_1 = arith.constant 0 : i32
    return %c0_i32, %c0_i32_0 : i32, i32
  }
  func.func @transform_11(%arg0: i32) -> (i32, i32) {
    %c0_i32 = arith.constant 0 : i32
    %c0_i32_0 = arith.constant 0 : i32
    %c0_i32_1 = arith.constant 0 : i32
    return %c0_i32, %c0_i32_0 : i32, i32
  }
  func.func @transform_12(%arg0: i32) -> (i32, i32) {
    %c0_i32 = arith.constant 0 : i32
    %c0_i32_0 = arith.constant 0 : i32
    %c0_i32_1 = arith.constant 0 : i32
    return %c0_i32, %c0_i32_0 : i32, i32
  }
  func.func @transform_13(%arg0: i32) -> (i32, i32) {
    %c0_i32 = arith.constant 0 : i32
    %c0_i32_0 = arith.constant 0 : i32
    %c0_i32_1 = arith.constant 0 : i32
    return %c0_i32, %c0_i32_0 : i32, i32
  }
  func.func @transform_14(%arg0: i32) -> (i32, i32, i32) {
    %c0_i32 = arith.constant 0 : i32
    %c0_i32_0 = arith.constant 0 : i32
    %c0_i32_1 = arith.constant 0 : i32
    return %arg0, %c0_i32, %c0_i32_0 : i32, i32, i32
  }
}

</mosaic_0001>

<llo_original>
// kernel: tpu_custom_call.1
$region0: #{tpu_custom_call.1}
  #allocation0 [shape = 'u32[]', space=smem, size = 0x4, offset = 0x4, fixed_abs, tag = 'smem constant byte address 0x4 - core index']
  #allocation1 [shape = 'u32[144,128]{1,0:T(1,128)}', space=vmem, size = 0x12000, scoped, tag = 'internal scratch']
  #allocation2 [shape = 'f32[2,512]{1,0:T(2,128)}', space=vmem, size = 0x1000, scoped, tag = 'scratch operand']
  %s0 = inlined_call_operand.vmem [shape: f32[2,16,4], index: 0, kind: input, shape index: {}]
  %s1 = inlined_call_operand.vmem [shape: bf16[2,4,128], index: 1, kind: input, shape index: {}]
  %s2 = inlined_call_operand.vmem [shape: f32[1,128], index: 2, kind: input, shape index: {}]
  %s3 = inlined_call_operand.vmem [shape: f32[1,128], index: 3, kind: input, shape index: {}]
  %s4 = inlined_call_operand.hbm [shape: bf16[256,128], index: 4, kind: input, shape index: {}]
  %s5 = inlined_call_operand.vmem [shape: f32[1,128], index: 5, kind: input, shape index: {}]
  %s6 = inlined_call_operand.vmem [shape: f32[1,128], index: 6, kind: input, shape index: {}]
  %s7 = inlined_call_operand.hbm [shape: bf16[128,512], index: 7, kind: input, shape index: {}]
  %s8 = inlined_call_operand.vmem [shape: f32[1,512], index: 8, kind: input, shape index: {}]
  %s9 = inlined_call_operand.hbm [shape: bf16[128,512], index: 9, kind: input, shape index: {}]
  %s10 = inlined_call_operand.hbm [shape: bf16[256,512], index: 10, kind: input, shape index: {}]
  %s11 = inlined_call_operand.vmem [shape: f32[1,512], index: 11, kind: input, shape index: {}]
  %s12 = inlined_call_operand.vmem [shape: bf16[128,128], index: 12, kind: input, shape index: {}]
  %s13 = inlined_call_operand.vmem [shape: f32[1,128], index: 13, kind: input, shape index: {}]
  %s14 = inlined_call_operand.hbm [shape: f32[2,1,128], index: 14, kind: output, shape index: {}]
  %s15 = sld [smem:[#allocation0]]
  $region105: #{tpu_custom_call.1} parent=0
    _
  %s17 = ssub.s32 1, %s15
  %s18 = scalar_select 0, %s17, %s15
  $region1: #{tpu_custom_call.1} parent=0
    #allocation3 [shape = 'u8[65536]{0}', space=vmem, size = 0x10000, scoped, tag = 'input window, operand 4, single buffered']
    #allocation4 [shape = 's32[2]{0}', space=sflag, size = 0x8, scoped, tag = 'scoped memory for tpu_custom_call.1']
    #allocation5 [shape = 's32[2]{0}', space=sflag, size = 0x8, scoped, tag = 'scoped memory for tpu_custom_call.1']
    #allocation6 [shape = 'u8[131072]{0}', space=vmem, size = 0x20000, scoped, tag = 'input window, operand 7, single buffered']
    #allocation7 [shape = 's32[1]{0}', space=sflag, size = 0x4, scoped, tag = 'scoped memory for tpu_custom_call.1']
    #allocation8 [shape = 'u8[131072]{0}', space=vmem, size = 0x20000, scoped, tag = 'input window, operand 9, single buffered']
    #allocation9 [shape = 'u8[262144]{0}', space=vmem, size = 0x40000, scoped, tag = 'input window, operand 10, single buffered']
    #allocation10 [shape = 's32[1]{0}', space=sflag, size = 0x4, scoped, tag = 'scoped memory for tpu_custom_call.1']
    #allocation11 [shape = 'u8[1024]{0}', space=vmem, size = 0x400, scoped, tag = 'output window, operand 0']
    %19 = vsyncpa [#allocation4], 0
    %20 = vsyncpa [#allocation7], 0
    %21 = vsyncpa [#allocation10], 0
    %22 = vsyncpa [#allocation5], 0
    %s23 = scalar_lea.sflag [#allocation5], 1
    %24 = vsyncpa %s23, 0
    loop: start=0, step=1, limit=4
    $region2: #{tpu_custom_call.1} parent=1 // loop_pre_header
      _
    $region3: #{tpu_custom_call.1} parent=1 // loop_header
      %s26 = sphi 0, %s30
      %p27 = scmp.ge.s32.totalorder %s26, 4
      %s36 = sphi 0, %s38
      %s39 = sphi 0, %s36
      %s40 = sphi 0, %s39
      %s56 = sphi 0, %s40
      %s60 = sphi 0, %s60
      %s62 = sphi 0, %s60
      %s63 = sphi 0, %s62
      %s77 = sphi 0, %s63
      %s81 = sphi 0, %s81
      %s83 = sphi 0, %s81
      %s84 = sphi 0, %s83
      %s98 = sphi 0, %s84
      %s102 = sphi 0, %s102
      %s104 = sphi 0, %s102
      %s105 = sphi 0, %s104
      %s119 = sphi 0, %s105
      %s123 = sphi 0, %s123
      %s125 = sphi 0, %s123
      %s126 = sphi 0, %s125
      %s140 = sphi 0, %s126
      %s144 = sphi 0, %s144
      %s146 = sphi 0, %s144
      %s147 = sphi 0, %s146
      %s161 = sphi 0, %s147
      %s165 = sphi 0, %s165
      %s167 = sphi 0, %s165
      %s168 = sphi 0, %s167
      %s182 = sphi 0, %s168
      %s186 = sphi 0, %s186
      %s188 = sphi 0, %s186
      %s189 = sphi 0, %s188
      %s203 = sphi 0, %s189
      %s207 = sphi 0, %s207
      %s209 = sphi 0, %s207
      %s210 = sphi 0, %s209
      %s224 = sphi 0, %s210
      %s228 = sphi 0, %s228
      %s230 = sphi 0, %s228
      %s231 = sphi 0, %s230
      %s245 = sphi 0, %s231
      %s249 = sphi 0, %s249
      %s251 = sphi 0, %s249
      %s252 = sphi 0, %s251
      %s266 = sphi 0, %s252
      %s270 = sphi 0, %s270
      %s272 = sphi 0, %s270
      %s273 = sphi 0, %s272
      %s287 = sphi 0, %s273
      %s291 = sphi 0, %s291
      %s293 = sphi 0, %s291
      %s294 = sphi 0, %s293
      %s308 = sphi 0, %s294
      %s312 = sphi 0, %s312
      %s314 = sphi 0, %s312
      %s315 = sphi 0, %s314
      %s329 = sphi 0, %s315
      %s335 = sphi 0, %s337
      %s338 = sphi 0, %s335
      %s339 = sphi 0, %s338
      %s355 = sphi 0, %s339
    $region4: #{tpu_custom_call.1} parent=1 // loop_header_branch
      %29 = sbr.rel (%p27) target = $region8
    $region5: #{tpu_custom_call.1} parent=1 // loop_body
      %s31 = ssub.s32 %s26, 1
      %s32 = ssub.s32 %s26, 2
      %s33 = sadd.s32 %s26, 1
      %s34 = ssub.s32 %s26, %s33
      %p35 = scmp.eq.s32.totalorder %s34, 0
      %s37 = sadd.s32 %s36, 1
      %s38 = scalar_select %p35, %s36, %s37
      %p41 = pneg %p35
      %p42 = scmp.eq.s32.totalorder %s26, 1
      %p43 = por %p41, %p42
      %p44 = scmp.ne.s32.totalorder %s36, %s39
      %p45 = scmp.eq.s32.totalorder %s26, 0
      %p46 = por %p44, %p45
      %p47 = scmp.ne.s32.totalorder %s36, %s39
      %p48 = scmp.eq.s32.totalorder %s31, 1
      %p49 = por %p47, %p48
      %p50 = scmp.ne.s32.totalorder %s39, %s40
      %p51 = scmp.eq.s32.totalorder %s31, 0
      %p52 = por %p50, %p51
      %p53 = scmp.ne.s32.totalorder %s39, %s40
      %p54 = scmp.eq.s32.totalorder %s32, 1
      %p55 = por %p53, %p54
      %p57 = scmp.ne.s32.totalorder %s40, %s56
      %p58 = scmp.eq.s32.totalorder %s32, 0
      %p59 = por %p57, %p58
      %s61 = sadd.s32 %s60, 1
      %p64 = scmp.eq.s32.totalorder %s26, 1
      %p65 = scmp.ne.s32.totalorder %s60, %s62
      %p66 = scmp.eq.s32.totalorder %s26, 0
      %p67 = por %p65, %p66
      %p68 = scmp.ne.s32.totalorder %s60, %s62
      %p69 = scmp.eq.s32.totalorder %s31, 1
      %p70 = por %p68, %p69
      %p71 = scmp.ne.s32.totalorder %s62, %s63
      %p72 = scmp.eq.s32.totalorder %s31, 0
      %p73 = por %p71, %p72
      %p74 = scmp.ne.s32.totalorder %s62, %s63
      %p75 = scmp.eq.s32.totalorder %s32, 1
      %p76 = por %p74, %p75
      %p78 = scmp.ne.s32.totalorder %s63, %s77
      %p79 = scmp.eq.s32.totalorder %s32, 0
      %p80 = por %p78, %p79
      %s82 = sadd.s32 %s81, 1
      %p85 = scmp.eq.s32.totalorder %s26, 1
      %p86 = scmp.ne.s32.totalorder %s81, %s83
      %p87 = scmp.eq.s32.totalorder %s26, 0
      %p88 = por %p86, %p87
      %p89 = scmp.ne.s32.totalorder %s81, %s83
      %p90 = scmp.eq.s32.totalorder %s31, 1
      %p91 = por %p89, %p90
      %p92 = scmp.ne.s32.totalorder %s83, %s84
      %p93 = scmp.eq.s32.totalorder %s31, 0
      %p94 = por %p92, %p93
      %p95 = scmp.ne.s32.totalorder %s83, %s84
      %p96 = scmp.eq.s32.totalorder %s32, 1
      %p97 = por %p95, %p96
      %p99 = scmp.ne.s32.totalorder %s84, %s98
      %p100 = scmp.eq.s32.totalorder %s32, 0
      %p101 = por %p99, %p100
      %s103 = sadd.s32 %s102, 1
      %p106 = scmp.eq.s32.totalorder %s26, 1
      %p107 = scmp.ne.s32.totalorder %s102, %s104
      %p108 = scmp.eq.s32.totalorder %s26, 0
      %p109 = por %p107, %p108
      %p110 = scmp.ne.s32.totalorder %s102, %s104
      %p111 = scmp.eq.s32.totalorder %s31, 1
      %p112 = por %p110, %p111
      %p113 = scmp.ne.s32.totalorder %s104, %s105
      %p114 = scmp.eq.s32.totalorder %s31, 0
      %p115 = por %p113, %p114
      %p116 = scmp.ne.s32.totalorder %s104, %s105
      %p117 = scmp.eq.s32.totalorder %s32, 1
      %p118 = por %p116, %p117
      %p120 = scmp.ne.s32.totalorder %s105, %s119
      %p121 = scmp.eq.s32.totalorder %s32, 0
      %p122 = por %p120, %p121
      %s124 = sadd.s32 %s123, 1
      %p127 = scmp.eq.s32.totalorder %s26, 1
      %p128 = scmp.ne.s32.totalorder %s123, %s125
      %p129 = scmp.eq.s32.totalorder %s26, 0
      %p130 = por %p128, %p129
      %p131 = scmp.ne.s32.totalorder %s123, %s125
      %p132 = scmp.eq.s32.totalorder %s31, 1
      %p133 = por %p131, %p132
      %p134 = scmp.ne.s32.totalorder %s125, %s126
      %p135 = scmp.eq.s32.totalorder %s31, 0
      %p136 = por %p134, %p135
      %p137 = scmp.ne.s32.totalorder %s125, %s126
      %p138 = scmp.eq.s32.totalorder %s32, 1
      %p139 = por %p137, %p138
      %p141 = scmp.ne.s32.totalorder %s126, %s140
      %p142 = scmp.eq.s32.totalorder %s32, 0
      %p143 = por %p141, %p142
      %s145 = sadd.s32 %s144, 1
      %p148 = scmp.eq.s32.totalorder %s26, 1
      %p149 = scmp.ne.s32.totalorder %s144, %s146
      %p150 = scmp.eq.s32.totalorder %s26, 0
      %p151 = por %p149, %p150
      %p152 = scmp.ne.s32.totalorder %s144, %s146
      %p153 = scmp.eq.s32.totalorder %s31, 1
      %p154 = por %p152, %p153
      %p155 = scmp.ne.s32.totalorder %s146, %s147
      %p156 = scmp.eq.s32.totalorder %s31, 0
      %p157 = por %p155, %p156
      %p158 = scmp.ne.s32.totalorder %s146, %s147
      %p159 = scmp.eq.s32.totalorder %s32, 1
      %p160 = por %p158, %p159
      %p162 = scmp.ne.s32.totalorder %s147, %s161
      %p163 = scmp.eq.s32.totalorder %s32, 0
      %p164 = por %p162, %p163
      %s166 = sadd.s32 %s165, 1
      %p169 = scmp.eq.s32.totalorder %s26, 1
      %p170 = scmp.ne.s32.totalorder %s165, %s167
      %p171 = scmp.eq.s32.totalorder %s26, 0
      %p172 = por %p170, %p171
      %p173 = scmp.ne.s32.totalorder %s165, %s167
      %p174 = scmp.eq.s32.totalorder %s31, 1
      %p175 = por %p173, %p174
      %p176 = scmp.ne.s32.totalorder %s167, %s168
      %p177 = scmp.eq.s32.totalorder %s31, 0
      %p178 = por %p176, %p177
      %p179 = scmp.ne.s32.totalorder %s167, %s168
      %p180 = scmp.eq.s32.totalorder %s32, 1
      %p181 = por %p179, %p180
      %p183 = scmp.ne.s32.totalorder %s168, %s182
      %p184 = scmp.eq.s32.totalorder %s32, 0
      %p185 = por %p183, %p184
      %s187 = sadd.s32 %s186, 1
      %p190 = scmp.eq.s32.totalorder %s26, 1
      %p191 = scmp.ne.s32.totalorder %s186, %s188
      %p192 = scmp.eq.s32.totalorder %s26, 0
      %p193 = por %p191, %p192
      %p194 = scmp.ne.s32.totalorder %s186, %s188
      %p195 = scmp.eq.s32.totalorder %s31, 1
      %p196 = por %p194, %p195
      %p197 = scmp.ne.s32.totalorder %s188, %s189
      %p198 = scmp.eq.s32.totalorder %s31, 0
      %p199 = por %p197, %p198
      %p200 = scmp.ne.s32.totalorder %s188, %s189
      %p201 = scmp.eq.s32.totalorder %s32, 1
      %p202 = por %p200, %p201
      %p204 = scmp.ne.s32.totalorder %s189, %s203
      %p205 = scmp.eq.s32.totalorder %s32, 0
      %p206 = por %p204, %p205
      %s208 = sadd.s32 %s207, 1
      %p211 = scmp.eq.s32.totalorder %s26, 1
      %p212 = scmp.ne.s32.totalorder %s207, %s209
      %p213 = scmp.eq.s32.totalorder %s26, 0
      %p214 = por %p212, %p213
      %p215 = scmp.ne.s32.totalorder %s207, %s209
      %p216 = scmp.eq.s32.totalorder %s31, 1
      %p217 = por %p215, %p216
      %p218 = scmp.ne.s32.totalorder %s209, %s210
      %p219 = scmp.eq.s32.totalorder %s31, 0
      %p220 = por %p218, %p219
      %p221 = scmp.ne.s32.totalorder %s209, %s210
      %p222 = scmp.eq.s32.totalorder %s32, 1
      %p223 = por %p221, %p222
      %p225 = scmp.ne.s32.totalorder %s210, %s224
      %p226 = scmp.eq.s32.totalorder %s32, 0
      %p227 = por %p225, %p226
      %s229 = sadd.s32 %s228, 1
      %p232 = scmp.eq.s32.totalorder %s26, 1
      %p233 = scmp.ne.s32.totalorder %s228, %s230
      %p234 = scmp.eq.s32.totalorder %s26, 0
      %p235 = por %p233, %p234
      %p236 = scmp.ne.s32.totalorder %s228, %s230
      %p237 = scmp.eq.s32.totalorder %s31, 1
      %p238 = por %p236, %p237
      %p239 = scmp.ne.s32.totalorder %s230, %s231
      %p240 = scmp.eq.s32.totalorder %s31, 0
      %p241 = por %p239, %p240
      %p242 = scmp.ne.s32.totalorder %s230, %s231
      %p243 = scmp.eq.s32.totalorder %s32, 1
      %p244 = por %p242, %p243
      %p246 = scmp.ne.s32.totalorder %s231, %s245
      %p247 = scmp.eq.s32.totalorder %s32, 0
      %p248 = por %p246, %p247
      %s250 = sadd.s32 %s249, 1
      %p253 = scmp.eq.s32.totalorder %s26, 1
      %p254 = scmp.ne.s32.totalorder %s249, %s251
      %p255 = scmp.eq.s32.totalorder %s26, 0
      %p256 = por %p254, %p255
      %p257 = scmp.ne.s32.totalorder %s249, %s251
      %p258 = scmp.eq.s32.totalorder %s31, 1
      %p259 = por %p257, %p258
      %p260 = scmp.ne.s32.totalorder %s251, %s252
      %p261 = scmp.eq.s32.totalorder %s31, 0
      %p262 = por %p260, %p261
      %p263 = scmp.ne.s32.totalorder %s251, %s252
      %p264 = scmp.eq.s32.totalorder %s32, 1
      %p265 = por %p263, %p264
      %p267 = scmp.ne.s32.totalorder %s252, %s266
      %p268 = scmp.eq.s32.totalorder %s32, 0
      %p269 = por %p267, %p268
      %s271 = sadd.s32 %s270, 1
      %p274 = scmp.eq.s32.totalorder %s26, 1
      %p275 = scmp.ne.s32.totalorder %s270, %s272
      %p276 = scmp.eq.s32.totalorder %s26, 0
      %p277 = por %p275, %p276
      %p278 = scmp.ne.s32.totalorder %s270, %s272
      %p279 = scmp.eq.s32.totalorder %s31, 1
      %p280 = por %p278, %p279
      %p281 = scmp.ne.s32.totalorder %s272, %s273
      %p282 = scmp.eq.s32.totalorder %s31, 0
      %p283 = por %p281, %p282
      %p284 = scmp.ne.s32.totalorder %s272, %s273
      %p285 = scmp.eq.s32.totalorder %s32, 1
      %p286 = por %p284, %p285
      %p288 = scmp.ne.s32.totalorder %s273, %s287
      %p289 = scmp.eq.s32.totalorder %s32, 0
      %p290 = por %p288, %p289
      %s292 = sadd.s32 %s291, 1
      %p295 = scmp.eq.s32.totalorder %s26, 1
      %p296 = scmp.ne.s32.totalorder %s291, %s293
      %p297 = scmp.eq.s32.totalorder %s26, 0
      %p298 = por %p296, %p297
      %p299 = scmp.ne.s32.totalorder %s291, %s293
      %p300 = scmp.eq.s32.totalorder %s31, 1
      %p301 = por %p299, %p300
      %p302 = scmp.ne.s32.totalorder %s293, %s294
      %p303 = scmp.eq.s32.totalorder %s31, 0
      %p304 = por %p302, %p303
      %p305 = scmp.ne.s32.totalorder %s293, %s294
      %p306 = scmp.eq.s32.totalorder %s32, 1
      %p307 = por %p305, %p306
      %p309 = scmp.ne.s32.totalorder %s294, %s308
      %p310 = scmp.eq.s32.totalorder %s32, 0
      %p311 = por %p309, %p310
      %s313 = sadd.s32 %s312, 1
      %p316 = scmp.eq.s32.totalorder %s26, 1
      %p317 = scmp.ne.s32.totalorder %s312, %s314
      %p318 = scmp.eq.s32.totalorder %s26, 0
      %p319 = por %p317, %p318
      %p320 = scmp.ne.s32.totalorder %s312, %s314
      %p321 = scmp.eq.s32.totalorder %s31, 1
      %p322 = por %p320, %p321
      %p323 = scmp.ne.s32.totalorder %s314, %s315
      %p324 = scmp.eq.s32.totalorder %s31, 0
      %p325 = por %p323, %p324
      %p326 = scmp.ne.s32.totalorder %s314, %s315
      %p327 = scmp.eq.s32.totalorder %s32, 1
      %p328 = por %p326, %p327
      %p330 = scmp.ne.s32.totalorder %s315, %s329
      %p331 = scmp.eq.s32.totalorder %s32, 0
      %p332 = por %p330, %p331
      %s333 = ssub.s32 %s26, %s33
      %p334 = scmp.eq.s32.totalorder %s333, 0
      %s336 = sadd.s32 %s335, 1
      %s337 = scalar_select %p334, %s335, %s336
      %p340 = pneg %p334
      %p341 = scmp.eq.s32.totalorder %s26, 1
      %p342 = por %p340, %p341
      %p343 = scmp.ne.s32.totalorder %s335, %s338
      %p344 = scmp.eq.s32.totalorder %s26, 0
      %p345 = por %p343, %p344
      %p346 = scmp.ne.s32.totalorder %s335, %s338
      %p347 = scmp.eq.s32.totalorder %s31, 1
      %p348 = por %p346, %p347
      %p349 = scmp.ne.s32.totalorder %s338, %s339
      %p350 = scmp.eq.s32.totalorder %s31, 0
      %p351 = por %p349, %p350
      %p352 = scmp.ne.s32.totalorder %s338, %s339
      %p353 = scmp.eq.s32.totalorder %s32, 1
      %p354 = por %p352, %p353
      %p356 = scmp.ne.s32.totalorder %s339, %s355
      %p357 = scmp.eq.s32.totalorder %s32, 0
      %p358 = por %p356, %p357
      %p359 = scmp.le.s32.totalorder 1, %s26
      %p360 = scmp.lt.s32.totalorder %s26, 3
      %p361 = pnand %p359, %p360
      %p362 = pneg %p361
      // Predicated region
      $region9: #{tpu_custom_call.1} parent=5 // pred_check
        _
      $region10: #{tpu_custom_call.1} parent=5 // pred_check_branch
        %364 = sbr.rel (%p361) target = $region12
      $region11: #{tpu_custom_call.1} parent=5 // pred_region
        %s365 = ssub.s32 %s26, 1
        // Predicated region
        $region13: #{tpu_custom_call.1} parent=11 // pred_check
          %p366 = pneg %p73
        $region14: #{tpu_custom_call.1} parent=11 // pred_check_branch
          %368 = sbr.rel (%p366) target = $region16
        $region15: #{tpu_custom_call.1} parent=11 // pred_region
          _
        $region16: #{tpu_custom_call.1} parent=11 // pred_fallthru
          _
        // Predicated region
        $region17: #{tpu_custom_call.1} parent=11 // pred_check
          %p369 = pneg %p94
        $region18: #{tpu_custom_call.1} parent=11 // pred_check_branch
          %371 = sbr.rel (%p369) target = $region20
        $region19: #{tpu_custom_call.1} parent=11 // pred_region
          _
        $region20: #{tpu_custom_call.1} parent=11 // pred_fallthru
          _
        // Predicated region
        $region21: #{tpu_custom_call.1} parent=11 // pred_check
          %p372 = pneg %p115
        $region22: #{tpu_custom_call.1} parent=11 // pred_check_branch
          %374 = sbr.rel (%p372) target = $region24
        $region23: #{tpu_custom_call.1} parent=11 // pred_region
          _
        $region24: #{tpu_custom_call.1} parent=11 // pred_fallthru
          _
        // Predicated region
        $region25: #{tpu_custom_call.1} parent=11 // pred_check
          %p375 = pneg %p136
        $region26: #{tpu_custom_call.1} parent=11 // pred_check_branch
          %377 = sbr.rel (%p375) target = $region28
        $region27: #{tpu_custom_call.1} parent=11 // pred_region
          %s379 = ssub.s32 2048, 2048
          %380 = vsyncadd [#allocation4], %s379
          %s381 = sshll.u32 [#allocation3], 4
          %s382 = int_to_ptr.vmem [resolvable:$true] %s381
          %387 = dma.hbm_to_vmem [thread:$0]  %s4, 2048, %s382, [#allocation4], 64, 64, 4
        $region28: #{tpu_custom_call.1} parent=11 // pred_fallthru
          _
        // Predicated region
        $region29: #{tpu_custom_call.1} parent=11 // pred_check
          %p388 = pneg %p157
        $region30: #{tpu_custom_call.1} parent=11 // pred_check_branch
          %390 = sbr.rel (%p388) target = $region32
        $region31: #{tpu_custom_call.1} parent=11 // pred_region
          _
        $region32: #{tpu_custom_call.1} parent=11 // pred_fallthru
          _
        // Predicated region
        $region33: #{tpu_custom_call.1} parent=11 // pred_check
          %p391 = pneg %p178
        $region34: #{tpu_custom_call.1} parent=11 // pred_check_branch
          %393 = sbr.rel (%p391) target = $region36
        $region35: #{tpu_custom_call.1} parent=11 // pred_region
          _
        $region36: #{tpu_custom_call.1} parent=11 // pred_fallthru
          _
        // Predicated region
        $region37: #{tpu_custom_call.1} parent=11 // pred_check
          %p394 = pneg %p199
        $region38: #{tpu_custom_call.1} parent=11 // pred_check_branch
          %396 = sbr.rel (%p394) target = $region40
        $region39: #{tpu_custom_call.1} parent=11 // pred_region
          %s398 = ssub.s32 4096, 4096
          %399 = vsyncadd [#allocation7], %s398
          %s400 = sshll.u32 [#allocation6], 4
          %s401 = int_to_ptr.vmem [resolvable:$true] %s400
          %406 = dma.hbm_to_vmem [thread:$0]  %s7, 4096, %s401, [#allocation7], 256, 256, 16
        $region40: #{tpu_custom_call.1} parent=11 // pred_fallthru
          _
        // Predicated region
        $region41: #{tpu_custom_call.1} parent=11 // pred_check
          %p407 = pneg %p220
        $region42: #{tpu_custom_call.1} parent=11 // pred_check_branch
          %409 = sbr.rel (%p407) target = $region44
        $region43: #{tpu_custom_call.1} parent=11 // pred_region
          _
        $region44: #{tpu_custom_call.1} parent=11 // pred_fallthru
          _
        // Predicated region
        $region45: #{tpu_custom_call.1} parent=11 // pred_check
          %p410 = pneg %p241
        $region46: #{tpu_custom_call.1} parent=11 // pred_check_branch
          %412 = sbr.rel (%p410) target = $region48
        $region47: #{tpu_custom_call.1} parent=11 // pred_region
          %s414 = ssub.s32 4096, 4096
          %415 = vsyncadd [#allocation7], %s414
          %s416 = sshll.u32 [#allocation8], 4
          %s417 = int_to_ptr.vmem [resolvable:$true] %s416
          %422 = dma.hbm_to_vmem [thread:$0]  %s9, 4096, %s417, [#allocation7], 256, 256, 16
        $region48: #{tpu_custom_call.1} parent=11 // pred_fallthru
          _
        // Predicated region
        $region49: #{tpu_custom_call.1} parent=11 // pred_check
          %p423 = pneg %p262
        $region50: #{tpu_custom_call.1} parent=11 // pred_check_branch
          %425 = sbr.rel (%p423) target = $region52
        $region51: #{tpu_custom_call.1} parent=11 // pred_region
          %s427 = ssub.s32 8192, 8192
          %428 = vsyncadd [#allocation10], %s427
          %s429 = sshll.u32 [#allocation9], 4
          %s430 = int_to_ptr.vmem [resolvable:$true] %s429
          %435 = dma.hbm_to_vmem [thread:$0]  %s10, 8192, %s430, [#allocation10], 256, 256, 16
        $region52: #{tpu_custom_call.1} parent=11 // pred_fallthru
          _
        // Predicated region
        $region53: #{tpu_custom_call.1} parent=11 // pred_check
          %p436 = pneg %p283
        $region54: #{tpu_custom_call.1} parent=11 // pred_check_branch
          %438 = sbr.rel (%p436) target = $region56
        $region55: #{tpu_custom_call.1} parent=11 // pred_region
          _
        $region56: #{tpu_custom_call.1} parent=11 // pred_fallthru
          _
        // Predicated region
        $region57: #{tpu_custom_call.1} parent=11 // pred_check
          %p439 = pneg %p304
        $region58: #{tpu_custom_call.1} parent=11 // pred_check_branch
          %441 = sbr.rel (%p439) target = $region60
        $region59: #{tpu_custom_call.1} parent=11 // pred_region
          _
        $region60: #{tpu_custom_call.1} parent=11 // pred_fallthru
          _
        // Predicated region
        $region61: #{tpu_custom_call.1} parent=11 // pred_check
          %p442 = pneg %p325
        $region62: #{tpu_custom_call.1} parent=11 // pred_check_branch
          %444 = sbr.rel (%p442) target = $region64
        $region63: #{tpu_custom_call.1} parent=11 // pred_region
          _
        $region64: #{tpu_custom_call.1} parent=11 // pred_fallthru
          _
      $region12: #{tpu_custom_call.1} parent=5 // pred_fallthru
        _
      %p445 = scmp.lt.s32.totalorder %s26, 2
      // Predicated region
      $region65: #{tpu_custom_call.1} parent=5 // pred_check
        %p446 = pneg %p445
      $region66: #{tpu_custom_call.1} parent=5 // pred_check_branch
        %448 = sbr.rel (%p446) target = $region68
      $region67: #{tpu_custom_call.1} parent=5 // pred_region
        // Predicated region
        $region69: #{tpu_custom_call.1} parent=67 // pred_check
          %p449 = pneg %p46
        $region70: #{tpu_custom_call.1} parent=67 // pred_check_branch
          %451 = sbr.rel (%p449) target = $region72
        $region71: #{tpu_custom_call.1} parent=67 // pred_region
          %p452 = scmp.lt.s32.totalorder %s26, 1
          %s453 = scalar_select %p452, %s26, 1
          %s454 = smul.addr %s453, 2
          %s455 = smul.addr %s454, 8
          %s456 = scalar_lea.vmem %s0, %s455
        $region72: #{tpu_custom_call.1} parent=67 // pred_fallthru
          _
      $region68: #{tpu_custom_call.1} parent=5 // pred_fallthru
        _
      %p457 = scmp.le.s32.totalorder 1, %s26
      %p458 = scmp.lt.s32.totalorder %s26, 3
      %p459 = pnand %p457, %p458
      %p460 = pneg %p459
      // Predicated region
      $region73: #{tpu_custom_call.1} parent=5 // pred_check
        _
      $region74: #{tpu_custom_call.1} parent=5 // pred_check_branch
        %462 = sbr.rel (%p459) target = $region76
      $region75: #{tpu_custom_call.1} parent=5 // pred_region
        %s463 = ssub.s32 %s26, 1
        // Predicated region
        $region77: #{tpu_custom_call.1} parent=75 // pred_check
          %p464 = pneg %p136
        $region78: #{tpu_custom_call.1} parent=75 // pred_check_branch
          %466 = sbr.rel (%p464) target = $region80
        $region79: #{tpu_custom_call.1} parent=75 // pred_region
          %467 = dma.done [#allocation4], 2048
        $region80: #{tpu_custom_call.1} parent=75 // pred_fallthru
          _
        // Predicated region
        $region81: #{tpu_custom_call.1} parent=75 // pred_check
          %p468 = pneg %p199
        $region82: #{tpu_custom_call.1} parent=75 // pred_check_branch
          %470 = sbr.rel (%p468) target = $region84
        $region83: #{tpu_custom_call.1} parent=75 // pred_region
          %471 = dma.done [#allocation7], 4096
        $region84: #{tpu_custom_call.1} parent=75 // pred_fallthru
          _
        // Predicated region
        $region85: #{tpu_custom_call.1} parent=75 // pred_check
          %p472 = pneg %p241
        $region86: #{tpu_custom_call.1} parent=75 // pred_check_branch
          %474 = sbr.rel (%p472) target = $region88
        $region87: #{tpu_custom_call.1} parent=75 // pred_region
          %475 = dma.done [#allocation7], 4096
        $region88: #{tpu_custom_call.1} parent=75 // pred_fallthru
          _
        // Predicated region
        $region89: #{tpu_custom_call.1} parent=75 // pred_check
          %p476 = pneg %p262
        $region90: #{tpu_custom_call.1} parent=75 // pred_check_branch
          %478 = sbr.rel (%p476) target = $region92
        $region91: #{tpu_custom_call.1} parent=75 // pred_region
          %479 = dma.done [#allocation10], 8192
        $region92: #{tpu_custom_call.1} parent=75 // pred_fallthru
          _
        %p480 = scmp.lt.s32.totalorder %s31, 1
        %s481 = scalar_select %p480, %s31, 1
        %s482 = smul.addr %s481, 2
        %s483 = smul.addr %s482, 8
        %s484 = scalar_lea.vmem %s0, %s483
        %p485 = pneg %p52
        %p486 = pneg %p49
        %p487 = pneg %p73
        %p488 = pneg %p70
        %p489 = pneg %p94
        %p490 = pneg %p91
        %p491 = pneg %p115
        %p492 = pneg %p112
        %p493 = pneg %p136
        %p494 = pneg %p133
        %p495 = pneg %p157
        %p496 = pneg %p154
        %p497 = pneg %p178
        %p498 = pneg %p175
        %p499 = pneg %p199
        %p500 = pneg %p196
        %p501 = pneg %p220
        %p502 = pneg %p217
        %p503 = pneg %p241
        %p504 = pneg %p238
        %p505 = pneg %p262
        %p506 = pneg %p259
        %p507 = pneg %p283
        %p508 = pneg %p280
        %p509 = pneg %p304
        %p510 = pneg %p301
        %p511 = pneg %p325
        %p512 = pneg %p322
        %p513 = pneg %p351
        %p514 = pneg %p348
        %s515 = sand.u32 %s338, 1
        %s516 = scalar_lea.sflag [#allocation5], %s515
        %s517 = sand.u32 %s338, 1
        %s518 = scalar_lea.vmem [#allocation11], %s517
        %p519 = scmp.lt.s32.totalorder %s31, 1
        %s520 = scalar_select %p519, %s31, 1
        %s521 = smul.addr %s520, 2
        %s522 = smul.addr %s521, 8
        %s523 = scalar_lea.vmem %s0, %s522
        %v525 = vld [vmem:[%s523] sm:$0xff]
        %v526 = vld [vmem:[%s523 + $0x8] sm:$0xff]
        %v527 = vpack.c.bf16 %v526, %v525
        %v528 = vld [vmem:[%s1] sm:$0x3]
        %vm529 = vcmask 31744
        %v531 = vsel %vm529, %v527, 0
        %vm533 = vcmask 1041408
        %v535 = vsel %vm533, %v528, 0
        %537 = vmatprep.subr.bf16.mxu0 0
        %538 = vmatpush1.bf16.msra.mxu0 %v535
        %539 = vmatprep.subr.bf16.mxu0 0
        %540 = vmatpush1.bf16.msra.mxu0 0
        %541 = vmatprep.subr.bf16.mxu0 0
        %542 = vmatpush1.bf16.msra.mxu0 0
        %543 = vmatprep.subr.bf16.mxu0 0
        %544 = vmatpush1.bf16.msra.mxu0 0
        %545 = vmatprep.subr.bf16.mxu0 0
        %546 = vmatpush1.bf16.msra.mxu0 0
        %547 = vmatprep.subr.bf16.mxu0 0
        %548 = vmatpush1.bf16.msra.mxu0 0
        %549 = vmatprep.subr.bf16.mxu0 0
        %550 = vmatpush1.bf16.msra.mxu0 0
        %551 = vmatprep.subr.bf16.mxu0 0
        %552 = vmatpush1.bf16.msra.mxu0 0
        %553 = vmatprep.subr.bf16.mxu0 0
        %554 = vmatpush1.bf16.msra.mxu0 0
        %555 = vmatprep.subr.bf16.mxu0 0
        %556 = vmatpush1.bf16.msra.mxu0 0
        %557 = vmatprep.subr.bf16.mxu0 0
        %558 = vmatpush1.bf16.msra.mxu0 0
        %559 = vmatprep.subr.bf16.mxu0 0
        %560 = vmatpush1.bf16.msra.mxu0 0
        %561 = vmatprep.subr.bf16.mxu0 0
        %562 = vmatpush1.bf16.msra.mxu0 0
        %563 = vmatprep.subr.bf16.mxu0 0
        %564 = vmatpush1.bf16.msra.mxu0 0
        %565 = vmatprep.subr.bf16.mxu0 0
        %566 = vmatpush1.bf16.msra.mxu0 0
        %567 = vmatprep.subr.bf16.mxu0 0
        %568 = vmatpush1.bf16.msra.mxu0 0
        %569 = vmatprep.mubr.bf16.mxu0 0
        %570 = vmatmul.mubr.bf16.gmra.mrb[0].mxu0 %v531
        %v571 = vpop.f32.mrb[0].mxu0
        %v572 = vadd.f32 0.0, %v571
        %v573 = vpop.f32.mrb[0].mxu0
        %v574 = vpop.f32.mrb[0].mxu0
        %v575 = vadd.f32 0.0, %v574
        %v576 = vpop.f32.mrb[0].mxu0
        %577 = vdwg.mxu0
        %vm580 = vcmask 1040384
        %v581 = vrot.slane %v572, 7
        %v582 = vrot.slane %v575, 7
        %v583 = vsel %vm580, %v581, %v582
        %v586 = vsel %vm580, 0.0, %v581
        %v587 = vadd.f32 %v586, 0.0
        %v588 = vadd.f32 %v583, 0.0
        %s589 = scalar_lea.vmem %s1, 2
        %v590 = vld [vmem:[%s589] sm:$0x3]
        %v592 = vsel %vm533, %v590, 0
        %594 = vmatprep.subr.bf16.mxu0 0
        %595 = vmatpush1.bf16.msra.mxu0 %v592
        %596 = vmatprep.subr.bf16.mxu0 0
        %597 = vmatpush1.bf16.msra.mxu0 0
        %598 = vmatprep.subr.bf16.mxu0 0
        %599 = vmatpush1.bf16.msra.mxu0 0
        %600 = vmatprep.subr.bf16.mxu0 0
        %601 = vmatpush1.bf16.msra.mxu0 0
        %602 = vmatprep.subr.bf16.mxu0 0
        %603 = vmatpush1.bf16.msra.mxu0 0
        %604 = vmatprep.subr.bf16.mxu0 0
        %605 = vmatpush1.bf16.msra.mxu0 0
        %606 = vmatprep.subr.bf16.mxu0 0
        %607 = vmatpush1.bf16.msra.mxu0 0
        %608 = vmatprep.subr.bf16.mxu0 0
        %609 = vmatpush1.bf16.msra.mxu0 0
        %610 = vmatprep.subr.bf16.mxu0 0
        %611 = vmatpush1.bf16.msra.mxu0 0
        %612 = vmatprep.subr.bf16.mxu0 0
        %613 = vmatpush1.bf16.msra.mxu0 0
        %614 = vmatprep.subr.bf16.mxu0 0
        %615 = vmatpush1.bf16.msra.mxu0 0
        %616 = vmatprep.subr.bf16.mxu0 0
        %617 = vmatpush1.bf16.msra.mxu0 0
        %618 = vmatprep.subr.bf16.mxu0 0
        %619 = vmatpush1.bf16.msra.mxu0 0
        %620 = vmatprep.subr.bf16.mxu0 0
        %621 = vmatpush1.bf16.msra.mxu0 0
        %622 = vmatprep.subr.bf16.mxu0 0
        %623 = vmatpush1.bf16.msra.mxu0 0
        %624 = vmatprep.subr.bf16.mxu0 0
        %625 = vmatpush1.bf16.msra.mxu0 0
        %626 = vmatprep.mubr.bf16.mxu0 0
        %627 = vmatmul.mubr.bf16.gmra.mrb[0].mxu0 %v531
        %v628 = vpop.f32.mrb[0].mxu0
        %v629 = vadd.f32 0.0, %v628
        %v630 = vpop.f32.mrb[0].mxu0
        %v631 = vpop.f32.mrb[0].mxu0
        %v632 = vadd.f32 0.0, %v631
        %v633 = vpop.f32.mrb[0].mxu0
        %634 = vdwg.mxu0
        %v635 = vadd.f32 %v587, %v629
        %v636 = vadd.f32 %v588, %v632
        %v637 = vld [vmem:[%s2] sm:$0x1]
        %v639 = vlaneseq
        %v640 = vshrl.u32 %v639, 7
        %v641 = vsub.s32 0, %v640
        %v642 = vrot.slane %v637, %v641
        %v644 = vmul.f32 %v635, %v642
        %v645 = vmul.f32 %v636, %v642
        %v646 = vld [vmem:[%s3] sm:$0x1]
        %v648 = vlaneseq
        %v649 = vshrl.u32 %v648, 7
        %v650 = vsub.s32 0, %v649
        %v651 = vrot.slane %v646, %v650
        %v653 = vadd.f32 %v644, %v651
        %v654 = vadd.f32 %v645, %v651
        %v655 = vmax.f32 %v653, 0.0
        %v656 = vmax.f32 %v654, 0.0
        %v659 = vrot.slane %v655, 7
        %v660 = vrot.slane %v656, 7
        %v661 = vsel %vm580, %v659, %v660
        %v664 = vsel %vm580, 0.0, %v659
        %v665 = vpack.c.bf16 %v661, %v664
        %v666 = vpack.c.bf16 %v656, %v655
        %v667 = vld [vmem:[#allocation3] sm:$0xf]
        %v668 = vld [vmem:[#allocation3 + $0x4] sm:$0xf]
        %v669 = vld [vmem:[#allocation3 + $0x8] sm:$0xf]
        %v670 = vld [vmem:[#allocation3 + $0xc] sm:$0xf]
        %v671 = vld [vmem:[#allocation3 + $0x10] sm:$0xf]
        %v672 = vld [vmem:[#allocation3 + $0x14] sm:$0xf]
        %v673 = vld [vmem:[#allocation3 + $0x18] sm:$0xf]
        %v674 = vld [vmem:[#allocation3 + $0x1c] sm:$0xf]
        %v675 = vld [vmem:[#allocation3 + $0x20] sm:$0xf]
        %v676 = vld [vmem:[#allocation3 + $0x24] sm:$0xf]
        %v677 = vld [vmem:[#allocation3 + $0x28] sm:$0xf]
        %v678 = vld [vmem:[#allocation3 + $0x2c] sm:$0xf]
        %v679 = vld [vmem:[#allocation3 + $0x30] sm:$0xf]
        %v680 = vld [vmem:[#allocation3 + $0x34] sm:$0xf]
        %v681 = vld [vmem:[#allocation3 + $0x38] sm:$0xf]
        %v682 = vld [vmem:[#allocation3 + $0x3c] sm:$0xf]
        %v683 = vld [vmem:[#allocation3 + $0x40] sm:$0xf]
        %v684 = vld [vmem:[#allocation3 + $0x44] sm:$0xf]
        %v685 = vld [vmem:[#allocation3 + $0x48] sm:$0xf]
        %v686 = vld [vmem:[#allocation3 + $0x4c] sm:$0xf]
        %v687 = vld [vmem:[#allocation3 + $0x50] sm:$0xf]
        %v688 = vld [vmem:[#allocation3 + $0x54] sm:$0xf]
        %v689 = vld [vmem:[#allocation3 + $0x58] sm:$0xf]
        %v690 = vld [vmem:[#allocation3 + $0x5c] sm:$0xf]
        %v691 = vld [vmem:[#allocation3 + $0x60] sm:$0xf]
        %v692 = vld [vmem:[#allocation3 + $0x64] sm:$0xf]
        %v693 = vld [vmem:[#allocation3 + $0x68] sm:$0xf]
        %v694 = vld [vmem:[#allocation3 + $0x6c] sm:$0xf]
        %v695 = vld [vmem:[#allocation3 + $0x70] sm:$0xf]
        %v696 = vld [vmem:[#allocation3 + $0x74] sm:$0xf]
        %v697 = vld [vmem:[#allocation3 + $0x78] sm:$0xf]
        %v698 = vld [vmem:[#allocation3 + $0x7c] sm:$0xf]
        %v731 = vunpack.c.l.b16 %v667
        %v732 = vunpack.c.l.b16 %v668
        %v733 = vunpack.c.l.b16 %v669
        %v734 = vunpack.c.l.b16 %v670
        %v735 = vunpack.c.l.b16 %v671
        %v736 = vunpack.c.l.b16 %v672
        %v737 = vunpack.c.l.b16 %v673
        %v738 = vunpack.c.l.b16 %v674
        %v739 = vunpack.c.l.b16 %v675
        %v740 = vunpack.c.l.b16 %v676
        %v741 = vunpack.c.l.b16 %v677
        %v742 = vunpack.c.l.b16 %v678
        %v743 = vunpack.c.l.b16 %v679
        %v744 = vunpack.c.l.b16 %v680
        %v745 = vunpack.c.l.b16 %v681
        %v746 = vunpack.c.l.b16 %v682
        %v747 = vunpack.c.l.b16 %v683
        %v748 = vunpack.c.l.b16 %v684
        %v749 = vunpack.c.l.b16 %v685
        %v750 = vunpack.c.l.b16 %v686
        %v751 = vunpack.c.l.b16 %v687
        %v752 = vunpack.c.l.b16 %v688
        %v753 = vunpack.c.l.b16 %v689
        %v754 = vunpack.c.l.b16 %v690
        %v755 = vunpack.c.l.b16 %v691
        %v756 = vunpack.c.l.b16 %v692
        %v757 = vunpack.c.l.b16 %v693
        %v758 = vunpack.c.l.b16 %v694
        %v759 = vunpack.c.l.b16 %v695
        %v760 = vunpack.c.l.b16 %v696
        %v761 = vunpack.c.l.b16 %v697
        %v762 = vunpack.c.l.b16 %v698
        %v763 = vpack.c.b16 %v732, %v731
        %v764 = vpack.c.b16 %v734, %v733
        %v765 = vpack.c.b16 %v736, %v735
        %v766 = vpack.c.b16 %v738, %v737
        %v767 = vpack.c.b16 %v740, %v739
        %v768 = vpack.c.b16 %v742, %v741
        %v769 = vpack.c.b16 %v744, %v743
        %v770 = vpack.c.b16 %v746, %v745
        %v771 = vpack.c.b16 %v748, %v747
        %v772 = vpack.c.b16 %v750, %v749
        %v773 = vpack.c.b16 %v752, %v751
        %v774 = vpack.c.b16 %v754, %v753
        %v775 = vpack.c.b16 %v756, %v755
        %v776 = vpack.c.b16 %v758, %v757
        %v777 = vpack.c.b16 %v760, %v759
        %v778 = vpack.c.b16 %v762, %v761
        %795 = vmatprep.subr.bf16.mxu0 0
        %796 = vmatpush1.bf16.msra.mxu0 %v763
        %797 = vmatprep.subr.bf16.mxu0 0
        %798 = vmatpush1.bf16.msra.mxu0 %v764
        %799 = vmatprep.subr.bf16.mxu0 0
        %800 = vmatpush1.bf16.msra.mxu0 %v765
        %801 = vmatprep.subr.bf16.mxu0 0
        %802 = vmatpush1.bf16.msra.mxu0 %v766
        %803 = vmatprep.subr.bf16.mxu0 0
        %804 = vmatpush1.bf16.msra.mxu0 %v767
        %805 = vmatprep.subr.bf16.mxu0 0
        %806 = vmatpush1.bf16.msra.mxu0 %v768
        %807 = vmatprep.subr.bf16.mxu0 0
        %808 = vmatpush1.bf16.msra.mxu0 %v769
        %809 = vmatprep.subr.bf16.mxu0 0
        %810 = vmatpush1.bf16.msra.mxu0 %v770
        %811 = vmatprep.subr.bf16.mxu0 0
        %812 = vmatpush1.bf16.msra.mxu0 %v771
        %813 = vmatprep.subr.bf16.mxu0 0
        %814 = vmatpush1.bf16.msra.mxu0 %v772
        %815 = vmatprep.subr.bf16.mxu0 0
        %816 = vmatpush1.bf16.msra.mxu0 %v773
        %817 = vmatprep.subr.bf16.mxu0 0
        %818 = vmatpush1.bf16.msra.mxu0 %v774
        %819 = vmatprep.subr.bf16.mxu0 0
        %820 = vmatpush1.bf16.msra.mxu0 %v775
        %821 = vmatprep.subr.bf16.mxu0 0
        %822 = vmatpush1.bf16.msra.mxu0 %v776
        %823 = vmatprep.subr.bf16.mxu0 0
        %824 = vmatpush1.bf16.msra.mxu0 %v777
        %825 = vmatprep.subr.bf16.mxu0 0
        %826 = vmatpush1.bf16.msra.mxu0 %v778
        %827 = vmatprep.mubr.bf16.mxu0 %v666
        %828 = vmatmul.mubr.bf16.gmra.mrb[0].mxu0 %v665
        %v829 = vpop.f32.mrb[0].mxu0
        %v830 = vadd.f32 0.0, %v829
        %v831 = vpop.f32.mrb[0].mxu0
        %v832 = vpop.f32.mrb[0].mxu0
        %v833 = vadd.f32 0.0, %v832
        %v834 = vpop.f32.mrb[0].mxu0
        %835 = vdwg.mxu0
        %v836 = vld [vmem:[%s5] sm:$0x1]
        %v838 = vlaneseq
        %v839 = vshrl.u32 %v838, 7
        %v840 = vsub.s32 0, %v839
        %v841 = vrot.slane %v836, %v840
        %v843 = vmul.f32 %v830, %v841
        %v844 = vmul.f32 %v833, %v841
        %v845 = vld [vmem:[%s6] sm:$0x1]
        %v847 = vlaneseq
        %v848 = vshrl.u32 %v847, 7
        %v849 = vsub.s32 0, %v848
        %v850 = vrot.slane %v845, %v849
        %v852 = vadd.f32 %v843, %v850
        %v853 = vadd.f32 %v844, %v850
        %v854 = vmax.f32 %v852, 0.0
        %v855 = vmax.f32 %v853, 0.0
        %v856 = vrot.slane %v854, 4
        %v857 = vadd.f32 %v854, %v856
        %v858 = vrot.slane %v857, 2
        %v859 = vadd.f32 %v857, %v858
        %v860 = vrot.slane %v859, 1
        %v861 = vadd.f32 %v859, %v860
        %v862 = vrot.slane %v855, 4
        %v863 = vadd.f32 %v855, %v862
        %v864 = vrot.slane %v863, 2
        %v865 = vadd.f32 %v863, %v864
        %v866 = vrot.slane %v865, 1
        %v867 = vadd.f32 %v865, %v866
        %v868 = vrcp.pop 8.0
        %v869 = vmul.f32 %v861, %v868
        %v870 = vmul.f32 %v867, %v868
        %v871 = vpack.c.bf16 %v869, %v869
        %v872 = vpack.c.bf16 %v870, %v870
        %v873 = vld [vmem:[#allocation6] sm:$0xff]
        %v874 = vld [vmem:[#allocation6 + $0x8] sm:$0xff]
        %v875 = vld [vmem:[#allocation6 + $0x10] sm:$0xff]
        %v876 = vld [vmem:[#allocation6 + $0x18] sm:$0xff]
        %v877 = vld [vmem:[#allocation6 + $0x20] sm:$0xff]
        %v878 = vld [vmem:[#allocation6 + $0x28] sm:$0xff]
        %v879 = vld [vmem:[#allocation6 + $0x30] sm:$0xff]
        %v880 = vld [vmem:[#allocation6 + $0x38] sm:$0xff]
        %v881 = vld [vmem:[#allocation6 + $0x40] sm:$0xff]
        %v882 = vld [vmem:[#allocation6 + $0x48] sm:$0xff]
        %v883 = vld [vmem:[#allocation6 + $0x50] sm:$0xff]
        %v884 = vld [vmem:[#allocation6 + $0x58] sm:$0xff]
        %v885 = vld [vmem:[#allocation6 + $0x60] sm:$0xff]
        %v886 = vld [vmem:[#allocation6 + $0x68] sm:$0xff]
        %v887 = vld [vmem:[#allocation6 + $0x70] sm:$0xff]
        %v888 = vld [vmem:[#allocation6 + $0x78] sm:$0xff]
        %v889 = vld [vmem:[#allocation6 + $0x80] sm:$0xff]
        %v890 = vld [vmem:[#allocation6 + $0x88] sm:$0xff]
        %v891 = vld [vmem:[#allocation6 + $0x90] sm:$0xff]
        %v892 = vld [vmem:[#allocation6 + $0x98] sm:$0xff]
        %v893 = vld [vmem:[#allocation6 + $0xa0] sm:$0xff]
        %v894 = vld [vmem:[#allocation6 + $0xa8] sm:$0xff]
        %v895 = vld [vmem:[#allocation6 + $0xb0] sm:$0xff]
        %v896 = vld [vmem:[#allocation6 + $0xb8] sm:$0xff]
        %v897 = vld [vmem:[#allocation6 + $0xc0] sm:$0xff]
        %v898 = vld [vmem:[#allocation6 + $0xc8] sm:$0xff]
        %v899 = vld [vmem:[#allocation6 + $0xd0] sm:$0xff]
        %v900 = vld [vmem:[#allocation6 + $0xd8] sm:$0xff]
        %v901 = vld [vmem:[#allocation6 + $0xe0] sm:$0xff]
        %v902 = vld [vmem:[#allocation6 + $0xe8] sm:$0xff]
        %v903 = vld [vmem:[#allocation6 + $0xf0] sm:$0xff]
        %v904 = vld [vmem:[#allocation6 + $0xf8] sm:$0xff]
        %v905 = vld [vmem:[%s8] sm:$0xf]
        %v907 = vlaneseq
        %v908 = vshrl.u32 %v907, 7
        %v909 = vsub.s32 0, %v908
        %v910 = vrot.slane %v905, %v909
        %v911 = vlaneseq
        %v912 = vshrl.u32 %v911, 7
        %v913 = vsub.s32 1, %v912
        %v914 = vrot.slane %v905, %v913
        %v915 = vlaneseq
        %v916 = vshrl.u32 %v915, 7
        %v917 = vsub.s32 2, %v916
        %v918 = vrot.slane %v905, %v917
        %v919 = vlaneseq
        %v920 = vshrl.u32 %v919, 7
        %v921 = vsub.s32 3, %v920
        %v922 = vrot.slane %v905, %v921
        %v929 = vunpack.c.l.b16 %v871
        %v930 = vunpack.c.l.b16 %v872
        %vm931 = vcmask 1041409
        %v932 = vsel %vm931, %v930, %v929
        %v933 = vpack.c.b16 %v932, %v932
        %v967 = vunpack.c.l.b16 %v873
        %v968 = vunpack.c.h.b16 %v873
        %v969 = vunpack.c.l.b16 %v874
        %v970 = vunpack.c.h.b16 %v874
        %v971 = vunpack.c.l.b16 %v875
        %v972 = vunpack.c.h.b16 %v875
        %v973 = vunpack.c.l.b16 %v876
        %v974 = vunpack.c.h.b16 %v876
        %v975 = vunpack.c.l.b16 %v877
        %v976 = vunpack.c.h.b16 %v877
        %v977 = vunpack.c.l.b16 %v878
        %v978 = vunpack.c.h.b16 %v878
        %v979 = vunpack.c.l.b16 %v879
        %v980 = vunpack.c.h.b16 %v879
        %v981 = vunpack.c.l.b16 %v880
        %v982 = vunpack.c.h.b16 %v880
        %v983 = vunpack.c.l.b16 %v881
        %v984 = vunpack.c.h.b16 %v881
        %v985 = vunpack.c.l.b16 %v882
        %v986 = vunpack.c.h.b16 %v882
        %v987 = vunpack.c.l.b16 %v883
        %v988 = vunpack.c.h.b16 %v883
        %v989 = vunpack.c.l.b16 %v884
        %v990 = vunpack.c.h.b16 %v884
        %v991 = vunpack.c.l.b16 %v885
        %v992 = vunpack.c.h.b16 %v885
        %v993 = vunpack.c.l.b16 %v886
        %v994 = vunpack.c.h.b16 %v886
        %v995 = vunpack.c.l.b16 %v887
        %v996 = vunpack.c.h.b16 %v887
        %v997 = vunpack.c.l.b16 %v888
        %v998 = vunpack.c.h.b16 %v888
        %v999 = vunpack.c.l.b16 %v889
        %v1000 = vunpack.c.h.b16 %v889
        %v1001 = vunpack.c.l.b16 %v890
        %v1002 = vunpack.c.h.b16 %v890
        %v1003 = vunpack.c.l.b16 %v891
        %v1004 = vunpack.c.h.b16 %v891
        %v1005 = vunpack.c.l.b16 %v892
        %v1006 = vunpack.c.h.b16 %v892
        %v1007 = vunpack.c.l.b16 %v893
        %v1008 = vunpack.c.h.b16 %v893
        %v1009 = vunpack.c.l.b16 %v894
        %v1010 = vunpack.c.h.b16 %v894
        %v1011 = vunpack.c.l.b16 %v895
        %v1012 = vunpack.c.h.b16 %v895
        %v1013 = vunpack.c.l.b16 %v896
        %v1014 = vunpack.c.h.b16 %v896
        %v1015 = vunpack.c.l.b16 %v897
        %v1016 = vunpack.c.h.b16 %v897
        %v1017 = vunpack.c.l.b16 %v898
        %v1018 = vunpack.c.h.b16 %v898
        %v1019 = vunpack.c.l.b16 %v899
        %v1020 = vunpack.c.h.b16 %v899
        %v1021 = vunpack.c.l.b16 %v900
        %v1022 = vunpack.c.h.b16 %v900
        %v1023 = vunpack.c.l.b16 %v901
        %v1024 = vunpack.c.h.b16 %v901
        %v1025 = vunpack.c.l.b16 %v902
        %v1026 = vunpack.c.h.b16 %v902
        %v1027 = vunpack.c.l.b16 %v903
        %v1028 = vunpack.c.h.b16 %v903
        %v1029 = vunpack.c.l.b16 %v904
        %v1030 = vunpack.c.h.b16 %v904
        %v1031 = vpack.c.b16 %v971, %v967
        %v1032 = vpack.c.b16 %v972, %v968
        %v1033 = vpack.c.b16 %v973, %v969
        %v1034 = vpack.c.b16 %v974, %v970
        %v1035 = vpack.c.b16 %v979, %v975
        %v1036 = vpack.c.b16 %v980, %v976
        %v1037 = vpack.c.b16 %v981, %v977
        %v1038 = vpack.c.b16 %v982, %v978
        %v1039 = vpack.c.b16 %v987, %v983
        %v1040 = vpack.c.b16 %v988, %v984
        %v1041 = vpack.c.b16 %v989, %v985
        %v1042 = vpack.c.b16 %v990, %v986
        %v1043 = vpack.c.b16 %v995, %v991
        %v1044 = vpack.c.b16 %v996, %v992
        %v1045 = vpack.c.b16 %v997, %v993
        %v1046 = vpack.c.b16 %v998, %v994
        %v1047 = vpack.c.b16 %v1003, %v999
        %v1048 = vpack.c.b16 %v1004, %v1000
        %v1049 = vpack.c.b16 %v1005, %v1001
        %v1050 = vpack.c.b16 %v1006, %v1002
        %v1051 = vpack.c.b16 %v1011, %v1007
        %v1052 = vpack.c.b16 %v1012, %v1008
        %v1053 = vpack.c.b16 %v1013, %v1009
        %v1054 = vpack.c.b16 %v1014, %v1010
        %v1055 = vpack.c.b16 %v1019, %v1015
        %v1056 = vpack.c.b16 %v1020, %v1016
        %v1057 = vpack.c.b16 %v1021, %v1017
        %v1058 = vpack.c.b16 %v1022, %v1018
        %v1059 = vpack.c.b16 %v1027, %v1023
        %v1060 = vpack.c.b16 %v1028, %v1024
        %v1061 = vpack.c.b16 %v1029, %v1025
        %v1062 = vpack.c.b16 %v1030, %v1026
        %1095 = vmatprep.subr.bf16.mxu0 %v1032
        %1096 = vmatpush1.bf16.msra.mxu0 %v1031
        %1097 = vmatprep.subr.bf16.mxu0 %v1036
        %1098 = vmatpush1.bf16.msra.mxu0 %v1035
        %1099 = vmatprep.subr.bf16.mxu0 %v1040
        %1100 = vmatpush1.bf16.msra.mxu0 %v1039
        %1101 = vmatprep.subr.bf16.mxu0 %v1044
        %1102 = vmatpush1.bf16.msra.mxu0 %v1043
        %1103 = vmatprep.subr.bf16.mxu0 %v1048
        %1104 = vmatpush1.bf16.msra.mxu0 %v1047
        %1105 = vmatprep.subr.bf16.mxu0 %v1052
        %1106 = vmatpush1.bf16.msra.mxu0 %v1051
        %1107 = vmatprep.subr.bf16.mxu0 %v1056
        %1108 = vmatpush1.bf16.msra.mxu0 %v1055
        %1109 = vmatprep.subr.bf16.mxu0 %v1060
        %1110 = vmatpush1.bf16.msra.mxu0 %v1059
        %1111 = vmatprep.subr.bf16.mxu0 0
        %1112 = vmatpush1.bf16.msra.mxu0 0
        %1113 = vmatprep.subr.bf16.mxu0 0
        %1114 = vmatpush1.bf16.msra.mxu0 0
        %1115 = vmatprep.subr.bf16.mxu0 0
        %1116 = vmatpush1.bf16.msra.mxu0 0
        %1117 = vmatprep.subr.bf16.mxu0 0
        %1118 = vmatpush1.bf16.msra.mxu0 0
        %1119 = vmatprep.subr.bf16.mxu0 0
        %1120 = vmatpush1.bf16.msra.mxu0 0
        %1121 = vmatprep.subr.bf16.mxu0 0
        %1122 = vmatpush1.bf16.msra.mxu0 0
        %1123 = vmatprep.subr.bf16.mxu0 0
        %1124 = vmatpush1.bf16.msra.mxu0 0
        %1125 = vmatprep.subr.bf16.mxu0 0
        %1126 = vmatpush1.bf16.msra.mxu0 0
        %1127 = vmatprep.mubr.bf16.mxu0 0
        %1128 = vmatmul.mubr.bf16.gmra.mrb[0].mxu0 %v933
        %v1129 = vpop.f32.mrb[0].mxu0
        %v1130 = vadd.f32 %v910, %v1129
        %v1131 = vpop.f32.mrb[0].mxu0
        %v1132 = vadd.f32 %v914, %v1131
        %v1133 = vpop.f32.mrb[0].mxu0
        %v1134 = vpop.f32.mrb[0].mxu0
        %1135 = vdwg.mxu0
        %1136 = vmatprep.subr.bf16.mxu0 %v1034
        %1137 = vmatpush1.bf16.msra.mxu0 %v1033
        %1138 = vmatprep.subr.bf16.mxu0 %v1038
        %1139 = vmatpush1.bf16.msra.mxu0 %v1037
        %1140 = vmatprep.subr.bf16.mxu0 %v1042
        %1141 = vmatpush1.bf16.msra.mxu0 %v1041
        %1142 = vmatprep.subr.bf16.mxu0 %v1046
        %1143 = vmatpush1.bf16.msra.mxu0 %v1045
        %1144 = vmatprep.subr.bf16.mxu0 %v1050
        %1145 = vmatpush1.bf16.msra.mxu0 %v1049
        %1146 = vmatprep.subr.bf16.mxu0 %v1054
        %1147 = vmatpush1.bf16.msra.mxu0 %v1053
        %1148 = vmatprep.subr.bf16.mxu0 %v1058
        %1149 = vmatpush1.bf16.msra.mxu0 %v1057
        %1150 = vmatprep.subr.bf16.mxu0 %v1062
        %1151 = vmatpush1.bf16.msra.mxu0 %v1061
        %1152 = vmatprep.subr.bf16.mxu0 0
        %1153 = vmatpush1.bf16.msra.mxu0 0
        %1154 = vmatprep.subr.bf16.mxu0 0
        %1155 = vmatpush1.bf16.msra.mxu0 0
        %1156 = vmatprep.subr.bf16.mxu0 0
        %1157 = vmatpush1.bf16.msra.mxu0 0
        %1158 = vmatprep.subr.bf16.mxu0 0
        %1159 = vmatpush1.bf16.msra.mxu0 0
        %1160 = vmatprep.subr.bf16.mxu0 0
        %1161 = vmatpush1.bf16.msra.mxu0 0
        %1162 = vmatprep.subr.bf16.mxu0 0
        %1163 = vmatpush1.bf16.msra.mxu0 0
        %1164 = vmatprep.subr.bf16.mxu0 0
        %1165 = vmatpush1.bf16.msra.mxu0 0
        %1166 = vmatprep.subr.bf16.mxu0 0
        %1167 = vmatpush1.bf16.msra.mxu0 0
        %1168 = vmatprep.mubr.bf16.mxu0 0
        %1169 = vmatmul.mubr.bf16.gmra.mrb[0].mxu0 %v933
        %v1170 = vpop.f32.mrb[0].mxu0
        %v1171 = vadd.f32 %v918, %v1170
        %v1172 = vpop.f32.mrb[0].mxu0
        %v1173 = vadd.f32 %v922, %v1172
        %v1174 = vpop.f32.mrb[0].mxu0
        %v1175 = vpop.f32.mrb[0].mxu0
        %1176 = vdwg.mxu0
        %v1181 = vcombine.low %v1130, %v1132
        %v1182 = vcombine.low %v1171, %v1173
        %v1184 = vunpack.c.l.s4 1983009808
        %v1185 = vunpack.c.0.s8 %v1184
        %v1186 = vlaneseq
        %v1187 = vshrl.u32 %v1186, 7
        %v1188 = vsub.s32 %v1185, %v1187
        %v1189 = vrot.slane %v1181, %v1188
        %v1191 = vunpack.c.l.s4 1983009808
        %v1192 = vunpack.c.0.s8 %v1191
        %v1193 = vlaneseq
        %v1194 = vshrl.u32 %v1193, 7
        %v1195 = vsub.s32 %v1192, %v1194
        %v1196 = vrot.slane %v1182, %v1195
        %v1197 = vcombine.low %v1189, %v1196
        %1199 = vst [vmem:[#allocation2] sm:$0xff] %v1197
        %v1200 = vld [vmem:[#allocation8] sm:$0xff]
        %v1201 = vld [vmem:[#allocation8 + $0x8] sm:$0xff]
        %v1202 = vld [vmem:[#allocation8 + $0x10] sm:$0xff]
        %v1203 = vld [vmem:[#allocation8 + $0x18] sm:$0xff]
        %v1204 = vld [vmem:[#allocation8 + $0x20] sm:$0xff]
        %v1205 = vld [vmem:[#allocation8 + $0x28] sm:$0xff]
        %v1206 = vld [vmem:[#allocation8 + $0x30] sm:$0xff]
        %v1207 = vld [vmem:[#allocation8 + $0x38] sm:$0xff]
        %v1208 = vld [vmem:[#allocation8 + $0x40] sm:$0xff]
        %v1209 = vld [vmem:[#allocation8 + $0x48] sm:$0xff]
        %v1210 = vld [vmem:[#allocation8 + $0x50] sm:$0xff]
        %v1211 = vld [vmem:[#allocation8 + $0x58] sm:$0xff]
        %v1212 = vld [vmem:[#allocation8 + $0x60] sm:$0xff]
        %v1213 = vld [vmem:[#allocation8 + $0x68] sm:$0xff]
        %v1214 = vld [vmem:[#allocation8 + $0x70] sm:$0xff]
        %v1215 = vld [vmem:[#allocation8 + $0x78] sm:$0xff]
        %v1216 = vld [vmem:[#allocation8 + $0x80] sm:$0xff]
        %v1217 = vld [vmem:[#allocation8 + $0x88] sm:$0xff]
        %v1218 = vld [vmem:[#allocation8 + $0x90] sm:$0xff]
        %v1219 = vld [vmem:[#allocation8 + $0x98] sm:$0xff]
        %v1220 = vld [vmem:[#allocation8 + $0xa0] sm:$0xff]
        %v1221 = vld [vmem:[#allocation8 + $0xa8] sm:$0xff]
        %v1222 = vld [vmem:[#allocation8 + $0xb0] sm:$0xff]
        %v1223 = vld [vmem:[#allocation8 + $0xb8] sm:$0xff]
        %v1224 = vld [vmem:[#allocation8 + $0xc0] sm:$0xff]
        %v1225 = vld [vmem:[#allocation8 + $0xc8] sm:$0xff]
        %v1226 = vld [vmem:[#allocation8 + $0xd0] sm:$0xff]
        %v1227 = vld [vmem:[#allocation8 + $0xd8] sm:$0xff]
        %v1228 = vld [vmem:[#allocation8 + $0xe0] sm:$0xff]
        %v1229 = vld [vmem:[#allocation8 + $0xe8] sm:$0xff]
        %v1230 = vld [vmem:[#allocation8 + $0xf0] sm:$0xff]
        %v1231 = vld [vmem:[#allocation8 + $0xf8] sm:$0xff]
        %v1232 = vld [vmem:[#allocation9] sm:$0xff]
        %v1233 = vld [vmem:[#allocation9 + $0x8] sm:$0xff]
        %v1234 = vld [vmem:[#allocation9 + $0x10] sm:$0xff]
        %v1235 = vld [vmem:[#allocation9 + $0x18] sm:$0xff]
        %v1236 = vld [vmem:[#allocation9 + $0x20] sm:$0xff]
        %v1237 = vld [vmem:[#allocation9 + $0x28] sm:$0xff]
        %v1238 = vld [vmem:[#allocation9 + $0x30] sm:$0xff]
        %v1239 = vld [vmem:[#allocation9 + $0x38] sm:$0xff]
        %v1240 = vld [vmem:[#allocation9 + $0x40] sm:$0xff]
        %v1241 = vld [vmem:[#allocation9 + $0x48] sm:$0xff]
        %v1242 = vld [vmem:[#allocation9 + $0x50] sm:$0xff]
        %v1243 = vld [vmem:[#allocation9 + $0x58] sm:$0xff]
        %v1244 = vld [vmem:[#allocation9 + $0x60] sm:$0xff]
        %v1245 = vld [vmem:[#allocation9 + $0x68] sm:$0xff]
        %v1246 = vld [vmem:[#allocation9 + $0x70] sm:$0xff]
        %v1247 = vld [vmem:[#allocation9 + $0x78] sm:$0xff]
        %v1248 = vld [vmem:[#allocation9 + $0x80] sm:$0xff]
        %v1249 = vld [vmem:[#allocation9 + $0x88] sm:$0xff]
        %v1250 = vld [vmem:[#allocation9 + $0x90] sm:$0xff]
        %v1251 = vld [vmem:[#allocation9 + $0x98] sm:$0xff]
        %v1252 = vld [vmem:[#allocation9 + $0xa0] sm:$0xff]
        %v1253 = vld [vmem:[#allocation9 + $0xa8] sm:$0xff]
        %v1254 = vld [vmem:[#allocation9 + $0xb0] sm:$0xff]
        %v1255 = vld [vmem:[#allocation9 + $0xb8] sm:$0xff]
        %v1256 = vld [vmem:[#allocation9 + $0xc0] sm:$0xff]
        %v1257 = vld [vmem:[#allocation9 + $0xc8] sm:$0xff]
        %v1258 = vld [vmem:[#allocation9 + $0xd0] sm:$0xff]
        %v1259 = vld [vmem:[#allocation9 + $0xd8] sm:$0xff]
        %v1260 = vld [vmem:[#allocation9 + $0xe0] sm:$0xff]
        %v1261 = vld [vmem:[#allocation9 + $0xe8] sm:$0xff]
        %v1262 = vld [vmem:[#allocation9 + $0xf0] sm:$0xff]
        %v1263 = vld [vmem:[#allocation9 + $0xf8] sm:$0xff]
        %v1264 = vld [vmem:[#allocation9 + $0x100] sm:$0xff]
        %v1265 = vld [vmem:[#allocation9 + $0x108] sm:$0xff]
        %v1266 = vld [vmem:[#allocation9 + $0x110] sm:$0xff]
        %v1267 = vld [vmem:[#allocation9 + $0x118] sm:$0xff]
        %v1268 = vld [vmem:[#allocation9 + $0x120] sm:$0xff]
        %v1269 = vld [vmem:[#allocation9 + $0x128] sm:$0xff]
        %v1270 = vld [vmem:[#allocation9 + $0x130] sm:$0xff]
        %v1271 = vld [vmem:[#allocation9 + $0x138] sm:$0xff]
        %v1272 = vld [vmem:[#allocation9 + $0x140] sm:$0xff]
        %v1273 = vld [vmem:[#allocation9 + $0x148] sm:$0xff]
        %v1274 = vld [vmem:[#allocation9 + $0x150] sm:$0xff]
        %v1275 = vld [vmem:[#allocation9 + $0x158] sm:$0xff]
        %v1276 = vld [vmem:[#allocation9 + $0x160] sm:$0xff]
        %v1277 = vld [vmem:[#allocation9 + $0x168] sm:$0xff]
        %v1278 = vld [vmem:[#allocation9 + $0x170] sm:$0xff]
        %v1279 = vld [vmem:[#allocation9 + $0x178] sm:$0xff]
        %v1280 = vld [vmem:[#allocation9 + $0x180] sm:$0xff]
        %v1281 = vld [vmem:[#allocation9 + $0x188] sm:$0xff]
        %v1282 = vld [vmem:[#allocation9 + $0x190] sm:$0xff]
        %v1283 = vld [vmem:[#allocation9 + $0x198] sm:$0xff]
        %v1284 = vld [vmem:[#allocation9 + $0x1a0] sm:$0xff]
        %v1285 = vld [vmem:[#allocation9 + $0x1a8] sm:$0xff]
        %v1286 = vld [vmem:[#allocation9 + $0x1b0] sm:$0xff]
        %v1287 = vld [vmem:[#allocation9 + $0x1b8] sm:$0xff]
        %v1288 = vld [vmem:[#allocation9 + $0x1c0] sm:$0xff]
        %v1289 = vld [vmem:[#allocation9 + $0x1c8] sm:$0xff]
        %v1290 = vld [vmem:[#allocation9 + $0x1d0] sm:$0xff]
        %v1291 = vld [vmem:[#allocation9 + $0x1d8] sm:$0xff]
        %v1292 = vld [vmem:[#allocation9 + $0x1e0] sm:$0xff]
        %v1293 = vld [vmem:[#allocation9 + $0x1e8] sm:$0xff]
        %v1294 = vld [vmem:[#allocation9 + $0x1f0] sm:$0xff]
        %v1295 = vld [vmem:[#allocation9 + $0x1f8] sm:$0xff]
        %v1296 = vld [vmem:[%s11] sm:$0xf]
        %v1297 = vld [vmem:[#allocation2] ss:$2 sm:$0xf]
        %v1330 = vunpack.c.l.b16 %v1200
        %v1331 = vunpack.c.h.b16 %v1200
        %v1332 = vunpack.c.l.b16 %v1201
        %v1333 = vunpack.c.h.b16 %v1201
        %v1334 = vunpack.c.l.b16 %v1202
        %v1335 = vunpack.c.h.b16 %v1202
        %v1336 = vunpack.c.l.b16 %v1203
        %v1337 = vunpack.c.h.b16 %v1203
        %v1338 = vunpack.c.l.b16 %v1204
        %v1339 = vunpack.c.h.b16 %v1204
        %v1340 = vunpack.c.l.b16 %v1205
        %v1341 = vunpack.c.h.b16 %v1205
        %v1342 = vunpack.c.l.b16 %v1206
        %v1343 = vunpack.c.h.b16 %v1206
        %v1344 = vunpack.c.l.b16 %v1207
        %v1345 = vunpack.c.h.b16 %v1207
        %v1346 = vunpack.c.l.b16 %v1208
        %v1347 = vunpack.c.h.b16 %v1208
        %v1348 = vunpack.c.l.b16 %v1209
        %v1349 = vunpack.c.h.b16 %v1209
        %v1350 = vunpack.c.l.b16 %v1210
        %v1351 = vunpack.c.h.b16 %v1210
        %v1352 = vunpack.c.l.b16 %v1211
        %v1353 = vunpack.c.h.b16 %v1211
        %v1354 = vunpack.c.l.b16 %v1212
        %v1355 = vunpack.c.h.b16 %v1212
        %v1356 = vunpack.c.l.b16 %v1213
        %v1357 = vunpack.c.h.b16 %v1213
        %v1358 = vunpack.c.l.b16 %v1214
        %v1359 = vunpack.c.h.b16 %v1214
        %v1360 = vunpack.c.l.b16 %v1215
        %v1361 = vunpack.c.h.b16 %v1215
        %v1362 = vunpack.c.l.b16 %v1216
        %v1363 = vunpack.c.h.b16 %v1216
        %v1364 = vunpack.c.l.b16 %v1217
        %v1365 = vunpack.c.h.b16 %v1217
        %v1366 = vunpack.c.l.b16 %v1218
        %v1367 = vunpack.c.h.b16 %v1218
        %v1368 = vunpack.c.l.b16 %v1219
        %v1369 = vunpack.c.h.b16 %v1219
        %v1370 = vunpack.c.l.b16 %v1220
        %v1371 = vunpack.c.h.b16 %v1220
        %v1372 = vunpack.c.l.b16 %v1221
        %v1373 = vunpack.c.h.b16 %v1221
        %v1374 = vunpack.c.l.b16 %v1222
        %v1375 = vunpack.c.h.b16 %v1222
        %v1376 = vunpack.c.l.b16 %v1223
        %v1377 = vunpack.c.h.b16 %v1223
        %v1378 = vunpack.c.l.b16 %v1224
        %v1379 = vunpack.c.h.b16 %v1224
        %v1380 = vunpack.c.l.b16 %v1225
        %v1381 = vunpack.c.h.b16 %v1225
        %v1382 = vunpack.c.l.b16 %v1226
        %v1383 = vunpack.c.h.b16 %v1226
        %v1384 = vunpack.c.l.b16 %v1227
        %v1385 = vunpack.c.h.b16 %v1227
        %v1386 = vunpack.c.l.b16 %v1228
        %v1387 = vunpack.c.h.b16 %v1228
        %v1388 = vunpack.c.l.b16 %v1229
        %v1389 = vunpack.c.h.b16 %v1229
        %v1390 = vunpack.c.l.b16 %v1230
        %v1391 = vunpack.c.h.b16 %v1230
        %v1392 = vunpack.c.l.b16 %v1231
        %v1393 = vunpack.c.h.b16 %v1231
        %v1394 = vpack.c.b16 %v1334, %v1330
        %v1395 = vpack.c.b16 %v1335, %v1331
        %v1396 = vpack.c.b16 %v1336, %v1332
        %v1397 = vpack.c.b16 %v1337, %v1333
        %v1398 = vpack.c.b16 %v1342, %v1338
        %v1399 = vpack.c.b16 %v1343, %v1339
        %v1400 = vpack.c.b16 %v1344, %v1340
        %v1401 = vpack.c.b16 %v1345, %v1341
        %v1402 = vpack.c.b16 %v1350, %v1346
        %v1403 = vpack.c.b16 %v1351, %v1347
        %v1404 = vpack.c.b16 %v1352, %v1348
        %v1405 = vpack.c.b16 %v1353, %v1349
        %v1406 = vpack.c.b16 %v1358, %v1354
        %v1407 = vpack.c.b16 %v1359, %v1355
        %v1408 = vpack.c.b16 %v1360, %v1356
        %v1409 = vpack.c.b16 %v1361, %v1357
        %v1410 = vpack.c.b16 %v1366, %v1362
        %v1411 = vpack.c.b16 %v1367, %v1363
        %v1412 = vpack.c.b16 %v1368, %v1364
        %v1413 = vpack.c.b16 %v1369, %v1365
        %v1414 = vpack.c.b16 %v1374, %v1370
        %v1415 = vpack.c.b16 %v1375, %v1371
        %v1416 = vpack.c.b16 %v1376, %v1372
        %v1417 = vpack.c.b16 %v1377, %v1373
        %v1418 = vpack.c.b16 %v1382, %v1378
        %v1419 = vpack.c.b16 %v1383, %v1379
        %v1420 = vpack.c.b16 %v1384, %v1380
        %v1421 = vpack.c.b16 %v1385, %v1381
        %v1422 = vpack.c.b16 %v1390, %v1386
        %v1423 = vpack.c.b16 %v1391, %v1387
        %v1424 = vpack.c.b16 %v1392, %v1388
        %v1425 = vpack.c.b16 %v1393, %v1389
        %1458 = vmatprep.subr.bf16.mxu0 %v1395
        %1459 = vmatpush1.bf16.msra.mxu0 %v1394
        %1460 = vmatprep.subr.bf16.mxu0 %v1399
        %1461 = vmatpush1.bf16.msra.mxu0 %v1398
        %1462 = vmatprep.subr.bf16.mxu0 %v1403
        %1463 = vmatpush1.bf16.msra.mxu0 %v1402
        %1464 = vmatprep.subr.bf16.mxu0 %v1407
        %1465 = vmatpush1.bf16.msra.mxu0 %v1406
        %1466 = vmatprep.subr.bf16.mxu0 %v1411
        %1467 = vmatpush1.bf16.msra.mxu0 %v1410
        %1468 = vmatprep.subr.bf16.mxu0 %v1415
        %1469 = vmatpush1.bf16.msra.mxu0 %v1414
        %1470 = vmatprep.subr.bf16.mxu0 %v1419
        %1471 = vmatpush1.bf16.msra.mxu0 %v1418
        %1472 = vmatprep.subr.bf16.mxu0 %v1423
        %1473 = vmatpush1.bf16.msra.mxu0 %v1422
        %1474 = vmatprep.subr.bf16.mxu0 0
        %1475 = vmatpush1.bf16.msra.mxu0 0
        %1476 = vmatprep.subr.bf16.mxu0 0
        %1477 = vmatpush1.bf16.msra.mxu0 0
        %1478 = vmatprep.subr.bf16.mxu0 0
        %1479 = vmatpush1.bf16.msra.mxu0 0
        %1480 = vmatprep.subr.bf16.mxu0 0
        %1481 = vmatpush1.bf16.msra.mxu0 0
        %1482 = vmatprep.subr.bf16.mxu0 0
        %1483 = vmatpush1.bf16.msra.mxu0 0
        %1484 = vmatprep.subr.bf16.mxu0 0
        %1485 = vmatpush1.bf16.msra.mxu0 0
        %1486 = vmatprep.subr.bf16.mxu0 0
        %1487 = vmatpush1.bf16.msra.mxu0 0
        %1488 = vmatprep.subr.bf16.mxu0 0
        %1489 = vmatpush1.bf16.msra.mxu0 0
        %1490 = vmatprep.mubr.bf16.mxu0 0
        %1491 = vmatmul.mubr.bf16.gmra.mrb[0].mxu0 0
        %v1492 = vpop.f32.mrb[0].mxu0
        %v1493 = vadd.f32 0.0, %v1492
        %v1494 = vpop.f32.mrb[0].mxu0
        %v1495 = vadd.f32 0.0, %v1494
        %v1496 = vpop.f32.mrb[0].mxu0
        %v1497 = vpop.f32.mrb[0].mxu0
        %1498 = vdwg.mxu0
        %1499 = vmatprep.subr.bf16.mxu0 %v1397
        %1500 = vmatpush1.bf16.msra.mxu0 %v1396
        %1501 = vmatprep.subr.bf16.mxu0 %v1401
        %1502 = vmatpush1.bf16.msra.mxu0 %v1400
        %1503 = vmatprep.subr.bf16.mxu0 %v1405
        %1504 = vmatpush1.bf16.msra.mxu0 %v1404
        %1505 = vmatprep.subr.bf16.mxu0 %v1409
        %1506 = vmatpush1.bf16.msra.mxu0 %v1408
        %1507 = vmatprep.subr.bf16.mxu0 %v1413
        %1508 = vmatpush1.bf16.msra.mxu0 %v1412
        %1509 = vmatprep.subr.bf16.mxu0 %v1417
        %1510 = vmatpush1.bf16.msra.mxu0 %v1416
        %1511 = vmatprep.subr.bf16.mxu0 %v1421
        %1512 = vmatpush1.bf16.msra.mxu0 %v1420
        %1513 = vmatprep.subr.bf16.mxu0 %v1425
        %1514 = vmatpush1.bf16.msra.mxu0 %v1424
        %1515 = vmatprep.subr.bf16.mxu0 0
        %1516 = vmatpush1.bf16.msra.mxu0 0
        %1517 = vmatprep.subr.bf16.mxu0 0
        %1518 = vmatpush1.bf16.msra.mxu0 0
        %1519 = vmatprep.subr.bf16.mxu0 0
        %1520 = vmatpush1.bf16.msra.mxu0 0
        %1521 = vmatprep.subr.bf16.mxu0 0
        %1522 = vmatpush1.bf16.msra.mxu0 0
        %1523 = vmatprep.subr.bf16.mxu0 0
        %1524 = vmatpush1.bf16.msra.mxu0 0
        %1525 = vmatprep.subr.bf16.mxu0 0
        %1526 = vmatpush1.bf16.msra.mxu0 0
        %1527 = vmatprep.subr.bf16.mxu0 0
        %1528 = vmatpush1.bf16.msra.mxu0 0
        %1529 = vmatprep.subr.bf16.mxu0 0
        %1530 = vmatpush1.bf16.msra.mxu0 0
        %1531 = vmatprep.mubr.bf16.mxu0 0
        %1532 = vmatmul.mubr.bf16.gmra.mrb[0].mxu0 0
        %v1533 = vpop.f32.mrb[0].mxu0
        %v1534 = vadd.f32 0.0, %v1533
        %v1535 = vpop.f32.mrb[0].mxu0
        %v1536 = vadd.f32 0.0, %v1535
        %v1537 = vpop.f32.mrb[0].mxu0
        %v1538 = vpop.f32.mrb[0].mxu0
        %1539 = vdwg.mxu0
        %v1544 = vcombine.low %v1493, %v1495
        %v1545 = vcombine.low %v1534, %v1536
        %v1547 = vunpack.c.l.s4 1966171168
        %v1548 = vunpack.c.0.s8 %v1547
        %v1549 = vlaneseq
        %v1550 = vshrl.u32 %v1549, 7
        %v1551 = vsub.s32 %v1548, %v1550
        %v1552 = vrot.slane %v1544, %v1551
        %v1554 = vunpack.c.l.s4 1966171168
        %v1555 = vunpack.c.0.s8 %v1554
        %v1556 = vlaneseq
        %v1557 = vshrl.u32 %v1556, 7
        %v1558 = vsub.s32 %v1555, %v1557
        %v1559 = vrot.slane %v1545, %v1558
        %v1560 = vcombine.low %v1552, %v1559
        %v1562 = vunpack.c.l.s4 1966171168
        %v1563 = vunpack.c.0.s8 %v1562
        %v1564 = vlaneseq
        %v1565 = vshrl.u32 %v1564, 7
        %v1566 = vsub.s32 %v1563, %v1565
        %v1567 = vrot.slane %v1560, %v1566
        %v1569 = vadd.f32 %v1297, %v1567
        %v1570 = vxor.u32 %v1569, 2147483648
        %v1571 = vmul.f32 %v1570, 1.442695
        %v1572 = vpow.pop %v1571
        %v1573 = vadd.f32 %v1572, 1.0
        %v1574 = vrcp.pop %v1573
        %v1575 = vmul.f32 1.0, %v1574
        %v1577 = vrot.slane %v1569, 1
        %v1579 = vxor.u32 %v1577, 2147483648
        %v1580 = vmul.f32 %v1579, 1.442695
        %v1581 = vpow.pop %v1580
        %v1582 = vadd.f32 %v1581, 1.0
        %v1583 = vrcp.pop %v1582
        %v1584 = vmul.f32 1.0, %v1583
        %v1585 = vrot.slane %v1569, 2
        %v1587 = vtanh.pop %v1585
        %v1588 = vrot.slane %v1569, 3
        %v1590 = vxor.u32 %v1588, 2147483648
        %v1591 = vmul.f32 %v1590, 1.442695
        %v1592 = vpow.pop %v1591
        %v1593 = vadd.f32 %v1592, 1.0
        %v1594 = vrcp.pop %v1593
        %v1595 = vmul.f32 1.0, %v1594
        %v1596 = vmul.f32 %v1584, 0.0
        %v1597 = vmul.f32 %v1575, %v1587
        %v1598 = vadd.f32 %v1596, %v1597
        %v1599 = vtanh.pop %v1598
        %v1600 = vmul.f32 %v1595, %v1599
        %v1601 = vpack.c.bf16 %v1600, %v1600
        %v1602 = vpack.c.bf16 0.0, 0.0
        %v1667 = vunpack.c.l.b16 %v1232
        %v1668 = vunpack.c.h.b16 %v1232
        %v1669 = vunpack.c.l.b16 %v1233
        %v1670 = vunpack.c.h.b16 %v1233
        %v1671 = vunpack.c.l.b16 %v1234
        %v1672 = vunpack.c.h.b16 %v1234
        %v1673 = vunpack.c.l.b16 %v1235
        %v1674 = vunpack.c.h.b16 %v1235
        %v1675 = vunpack.c.l.b16 %v1236
        %v1676 = vunpack.c.h.b16 %v1236
        %v1677 = vunpack.c.l.b16 %v1237
        %v1678 = vunpack.c.h.b16 %v1237
        %v1679 = vunpack.c.l.b16 %v1238
        %v1680 = vunpack.c.h.b16 %v1238
        %v1681 = vunpack.c.l.b16 %v1239
        %v1682 = vunpack.c.h.b16 %v1239
        %v1683 = vunpack.c.l.b16 %v1240
        %v1684 = vunpack.c.h.b16 %v1240
        %v1685 = vunpack.c.l.b16 %v1241
        %v1686 = vunpack.c.h.b16 %v1241
        %v1687 = vunpack.c.l.b16 %v1242
        %v1688 = vunpack.c.h.b16 %v1242
        %v1689 = vunpack.c.l.b16 %v1243
        %v1690 = vunpack.c.h.b16 %v1243
        %v1691 = vunpack.c.l.b16 %v1244
        %v1692 = vunpack.c.h.b16 %v1244
        %v1693 = vunpack.c.l.b16 %v1245
        %v1694 = vunpack.c.h.b16 %v1245
        %v1695 = vunpack.c.l.b16 %v1246
        %v1696 = vunpack.c.h.b16 %v1246
        %v1697 = vunpack.c.l.b16 %v1247
        %v1698 = vunpack.c.h.b16 %v1247
        %v1699 = vunpack.c.l.b16 %v1248
        %v1700 = vunpack.c.h.b16 %v1248
        %v1701 = vunpack.c.l.b16 %v1249
        %v1702 = vunpack.c.h.b16 %v1249
        %v1703 = vunpack.c.l.b16 %v1250
        %v1704 = vunpack.c.h.b16 %v1250
        %v1705 = vunpack.c.l.b16 %v1251
        %v1706 = vunpack.c.h.b16 %v1251
        %v1707 = vunpack.c.l.b16 %v1252
        %v1708 = vunpack.c.h.b16 %v1252
        %v1709 = vunpack.c.l.b16 %v1253
        %v1710 = vunpack.c.h.b16 %v1253
        %v1711 = vunpack.c.l.b16 %v1254
        %v1712 = vunpack.c.h.b16 %v1254
        %v1713 = vunpack.c.l.b16 %v1255
        %v1714 = vunpack.c.h.b16 %v1255
        %v1715 = vunpack.c.l.b16 %v1256
        %v1716 = vunpack.c.h.b16 %v1256
        %v1717 = vunpack.c.l.b16 %v1257
        %v1718 = vunpack.c.h.b16 %v1257
        %v1719 = vunpack.c.l.b16 %v1258
        %v1720 = vunpack.c.h.b16 %v1258
        %v1721 = vunpack.c.l.b16 %v1259
        %v1722 = vunpack.c.h.b16 %v1259
        %v1723 = vunpack.c.l.b16 %v1260
        %v1724 = vunpack.c.h.b16 %v1260
        %v1725 = vunpack.c.l.b16 %v1261
        %v1726 = vunpack.c.h.b16 %v1261
        %v1727 = vunpack.c.l.b16 %v1262
        %v1728 = vunpack.c.h.b16 %v1262
        %v1729 = vunpack.c.l.b16 %v1263
        %v1730 = vunpack.c.h.b16 %v1263
        %v1731 = vunpack.c.l.b16 %v1264
        %v1732 = vunpack.c.h.b16 %v1264
        %v1733 = vunpack.c.l.b16 %v1265
        %v1734 = vunpack.c.h.b16 %v1265
        %v1735 = vunpack.c.l.b16 %v1266
        %v1736 = vunpack.c.h.b16 %v1266
        %v1737 = vunpack.c.l.b16 %v1267
        %v1738 = vunpack.c.h.b16 %v1267
        %v1739 = vunpack.c.l.b16 %v1268
        %v1740 = vunpack.c.h.b16 %v1268
        %v1741 = vunpack.c.l.b16 %v1269
        %v1742 = vunpack.c.h.b16 %v1269
        %v1743 = vunpack.c.l.b16 %v1270
        %v1744 = vunpack.c.h.b16 %v1270
        %v1745 = vunpack.c.l.b16 %v1271
        %v1746 = vunpack.c.h.b16 %v1271
        %v1747 = vunpack.c.l.b16 %v1272
        %v1748 = vunpack.c.h.b16 %v1272
        %v1749 = vunpack.c.l.b16 %v1273
        %v1750 = vunpack.c.h.b16 %v1273
        %v1751 = vunpack.c.l.b16 %v1274
        %v1752 = vunpack.c.h.b16 %v1274
        %v1753 = vunpack.c.l.b16 %v1275
        %v1754 = vunpack.c.h.b16 %v1275
        %v1755 = vunpack.c.l.b16 %v1276
        %v1756 = vunpack.c.h.b16 %v1276
        %v1757 = vunpack.c.l.b16 %v1277
        %v1758 = vunpack.c.h.b16 %v1277
        %v1759 = vunpack.c.l.b16 %v1278
        %v1760 = vunpack.c.h.b16 %v1278
        %v1761 = vunpack.c.l.b16 %v1279
        %v1762 = vunpack.c.h.b16 %v1279
        %v1763 = vunpack.c.l.b16 %v1280
        %v1764 = vunpack.c.h.b16 %v1280
        %v1765 = vunpack.c.l.b16 %v1281
        %v1766 = vunpack.c.h.b16 %v1281
        %v1767 = vunpack.c.l.b16 %v1282
        %v1768 = vunpack.c.h.b16 %v1282
        %v1769 = vunpack.c.l.b16 %v1283
        %v1770 = vunpack.c.h.b16 %v1283
        %v1771 = vunpack.c.l.b16 %v1284
        %v1772 = vunpack.c.h.b16 %v1284
        %v1773 = vunpack.c.l.b16 %v1285
        %v1774 = vunpack.c.h.b16 %v1285
        %v1775 = vunpack.c.l.b16 %v1286
        %v1776 = vunpack.c.h.b16 %v1286
        %v1777 = vunpack.c.l.b16 %v1287
        %v1778 = vunpack.c.h.b16 %v1287
        %v1779 = vunpack.c.l.b16 %v1288
        %v1780 = vunpack.c.h.b16 %v1288
        %v1781 = vunpack.c.l.b16 %v1289
        %v1782 = vunpack.c.h.b16 %v1289
        %v1783 = vunpack.c.l.b16 %v1290
        %v1784 = vunpack.c.h.b16 %v1290
        %v1785 = vunpack.c.l.b16 %v1291
        %v1786 = vunpack.c.h.b16 %v1291
        %v1787 = vunpack.c.l.b16 %v1292
        %v1788 = vunpack.c.h.b16 %v1292
        %v1789 = vunpack.c.l.b16 %v1293
        %v1790 = vunpack.c.h.b16 %v1293
        %v1791 = vunpack.c.l.b16 %v1294
        %v1792 = vunpack.c.h.b16 %v1294
        %v1793 = vunpack.c.l.b16 %v1295
        %v1794 = vunpack.c.h.b16 %v1295
        %v1795 = vpack.c.b16 %v1671, %v1667
        %v1796 = vpack.c.b16 %v1672, %v1668
        %v1797 = vpack.c.b16 %v1673, %v1669
        %v1798 = vpack.c.b16 %v1674, %v1670
        %v1799 = vpack.c.b16 %v1679, %v1675
        %v1800 = vpack.c.b16 %v1680, %v1676
        %v1801 = vpack.c.b16 %v1681, %v1677
        %v1802 = vpack.c.b16 %v1682, %v1678
        %v1803 = vpack.c.b16 %v1687, %v1683
        %v1804 = vpack.c.b16 %v1688, %v1684
        %v1805 = vpack.c.b16 %v1689, %v1685
        %v1806 = vpack.c.b16 %v1690, %v1686
        %v1807 = vpack.c.b16 %v1695, %v1691
        %v1808 = vpack.c.b16 %v1696, %v1692
        %v1809 = vpack.c.b16 %v1697, %v1693
        %v1810 = vpack.c.b16 %v1698, %v1694
        %v1811 = vpack.c.b16 %v1703, %v1699
        %v1812 = vpack.c.b16 %v1704, %v1700
        %v1813 = vpack.c.b16 %v1705, %v1701
        %v1814 = vpack.c.b16 %v1706, %v1702
        %v1815 = vpack.c.b16 %v1711, %v1707
        %v1816 = vpack.c.b16 %v1712, %v1708
        %v1817 = vpack.c.b16 %v1713, %v1709
        %v1818 = vpack.c.b16 %v1714, %v1710
        %v1819 = vpack.c.b16 %v1719, %v1715
        %v1820 = vpack.c.b16 %v1720, %v1716
        %v1821 = vpack.c.b16 %v1721, %v1717
        %v1822 = vpack.c.b16 %v1722, %v1718
        %v1823 = vpack.c.b16 %v1727, %v1723
        %v1824 = vpack.c.b16 %v1728, %v1724
        %v1825 = vpack.c.b16 %v1729, %v1725
        %v1826 = vpack.c.b16 %v1730, %v1726
        %v1827 = vpack.c.b16 %v1735, %v1731
        %v1828 = vpack.c.b16 %v1736, %v1732
        %v1829 = vpack.c.b16 %v1737, %v1733
        %v1830 = vpack.c.b16 %v1738, %v1734
        %v1831 = vpack.c.b16 %v1743, %v1739
        %v1832 = vpack.c.b16 %v1744, %v1740
        %v1833 = vpack.c.b16 %v1745, %v1741
        %v1834 = vpack.c.b16 %v1746, %v1742
        %v1835 = vpack.c.b16 %v1751, %v1747
        %v1836 = vpack.c.b16 %v1752, %v1748
        %v1837 = vpack.c.b16 %v1753, %v1749
        %v1838 = vpack.c.b16 %v1754, %v1750
        %v1839 = vpack.c.b16 %v1759, %v1755
        %v1840 = vpack.c.b16 %v1760, %v1756
        %v1841 = vpack.c.b16 %v1761, %v1757
        %v1842 = vpack.c.b16 %v1762, %v1758
        %v1843 = vpack.c.b16 %v1767, %v1763
        %v1844 = vpack.c.b16 %v1768, %v1764
        %v1845 = vpack.c.b16 %v1769, %v1765
        %v1846 = vpack.c.b16 %v1770, %v1766
        %v1847 = vpack.c.b16 %v1775, %v1771
        %v1848 = vpack.c.b16 %v1776, %v1772
        %v1849 = vpack.c.b16 %v1777, %v1773
        %v1850 = vpack.c.b16 %v1778, %v1774
        %v1851 = vpack.c.b16 %v1783, %v1779
        %v1852 = vpack.c.b16 %v1784, %v1780
        %v1853 = vpack.c.b16 %v1785, %v1781
        %v1854 = vpack.c.b16 %v1786, %v1782
        %v1855 = vpack.c.b16 %v1791, %v1787
        %v1856 = vpack.c.b16 %v1792, %v1788
        %v1857 = vpack.c.b16 %v1793, %v1789
        %v1858 = vpack.c.b16 %v1794, %v1790
        %v1924 = vlaneseq
        %v1925 = vshrl.u32 %v1924, 7
        %v1926 = vsub.s32 0, %v1925
        %v1927 = vrot.slane %v1296, %v1926
        %v1928 = vlaneseq
        %v1929 = vshrl.u32 %v1928, 7
        %v1930 = vsub.s32 1, %v1929
        %v1931 = vrot.slane %v1296, %v1930
        %v1932 = vlaneseq
        %v1933 = vshrl.u32 %v1932, 7
        %v1934 = vsub.s32 2, %v1933
        %v1935 = vrot.slane %v1296, %v1934
        %v1936 = vlaneseq
        %v1937 = vshrl.u32 %v1936, 7
        %v1938 = vsub.s32 3, %v1937
        %v1939 = vrot.slane %v1296, %v1938
        %1944 = vmatprep.subr.bf16.mxu0 %v1796
        %1945 = vmatpush1.bf16.msra.mxu0 %v1795
        %1946 = vmatprep.subr.bf16.mxu0 %v1800
        %1947 = vmatpush1.bf16.msra.mxu0 %v1799
        %1948 = vmatprep.subr.bf16.mxu0 %v1804
        %1949 = vmatpush1.bf16.msra.mxu0 %v1803
        %1950 = vmatprep.subr.bf16.mxu0 %v1808
        %1951 = vmatpush1.bf16.msra.mxu0 %v1807
        %1952 = vmatprep.subr.bf16.mxu0 %v1812
        %1953 = vmatpush1.bf16.msra.mxu0 %v1811
        %1954 = vmatprep.subr.bf16.mxu0 %v1816
        %1955 = vmatpush1.bf16.msra.mxu0 %v1815
        %1956 = vmatprep.subr.bf16.mxu0 %v1820
        %1957 = vmatpush1.bf16.msra.mxu0 %v1819
        %1958 = vmatprep.subr.bf16.mxu0 %v1824
        %1959 = vmatpush1.bf16.msra.mxu0 %v1823
        %1960 = vmatprep.subr.bf16.mxu0 %v1828
        %1961 = vmatpush1.bf16.msra.mxu0 %v1827
        %1962 = vmatprep.subr.bf16.mxu0 %v1832
        %1963 = vmatpush1.bf16.msra.mxu0 %v1831
        %1964 = vmatprep.subr.bf16.mxu0 %v1836
        %1965 = vmatpush1.bf16.msra.mxu0 %v1835
        %1966 = vmatprep.subr.bf16.mxu0 %v1840
        %1967 = vmatpush1.bf16.msra.mxu0 %v1839
        %1968 = vmatprep.subr.bf16.mxu0 %v1844
        %1969 = vmatpush1.bf16.msra.mxu0 %v1843
        %1970 = vmatprep.subr.bf16.mxu0 %v1848
        %1971 = vmatpush1.bf16.msra.mxu0 %v1847
        %1972 = vmatprep.subr.bf16.mxu0 %v1852
        %1973 = vmatpush1.bf16.msra.mxu0 %v1851
        %1974 = vmatprep.subr.bf16.mxu0 %v1856
        %1975 = vmatpush1.bf16.msra.mxu0 %v1855
        %1976 = vmatprep.mubr.bf16.mxu0 %v1602
        %1977 = vmatmul.mubr.bf16.gmra.mrb[0].mxu0 %v1601
        %v1978 = vpop.f32.mrb[0].mxu0
        %v1979 = vadd.f32 %v1927, %v1978
        %v1980 = vpop.f32.mrb[0].mxu0
        %v1981 = vadd.f32 %v1931, %v1980
        %v1982 = vpop.f32.mrb[0].mxu0
        %v1983 = vpop.f32.mrb[0].mxu0
        %1984 = vdwg.mxu0
        %1985 = vmatprep.subr.bf16.mxu0 %v1798
        %1986 = vmatpush1.bf16.msra.mxu0 %v1797
        %1987 = vmatprep.subr.bf16.mxu0 %v1802
        %1988 = vmatpush1.bf16.msra.mxu0 %v1801
        %1989 = vmatprep.subr.bf16.mxu0 %v1806
        %1990 = vmatpush1.bf16.msra.mxu0 %v1805
        %1991 = vmatprep.subr.bf16.mxu0 %v1810
        %1992 = vmatpush1.bf16.msra.mxu0 %v1809
        %1993 = vmatprep.subr.bf16.mxu0 %v1814
        %1994 = vmatpush1.bf16.msra.mxu0 %v1813
        %1995 = vmatprep.subr.bf16.mxu0 %v1818
        %1996 = vmatpush1.bf16.msra.mxu0 %v1817
        %1997 = vmatprep.subr.bf16.mxu0 %v1822
        %1998 = vmatpush1.bf16.msra.mxu0 %v1821
        %1999 = vmatprep.subr.bf16.mxu0 %v1826
        %2000 = vmatpush1.bf16.msra.mxu0 %v1825
        %2001 = vmatprep.subr.bf16.mxu0 %v1830
        %2002 = vmatpush1.bf16.msra.mxu0 %v1829
        %2003 = vmatprep.subr.bf16.mxu0 %v1834
        %2004 = vmatpush1.bf16.msra.mxu0 %v1833
        %2005 = vmatprep.subr.bf16.mxu0 %v1838
        %2006 = vmatpush1.bf16.msra.mxu0 %v1837
        %2007 = vmatprep.subr.bf16.mxu0 %v1842
        %2008 = vmatpush1.bf16.msra.mxu0 %v1841
        %2009 = vmatprep.subr.bf16.mxu0 %v1846
        %2010 = vmatpush1.bf16.msra.mxu0 %v1845
        %2011 = vmatprep.subr.bf16.mxu0 %v1850
        %2012 = vmatpush1.bf16.msra.mxu0 %v1849
        %2013 = vmatprep.subr.bf16.mxu0 %v1854
        %2014 = vmatpush1.bf16.msra.mxu0 %v1853
        %2015 = vmatprep.subr.bf16.mxu0 %v1858
        %2016 = vmatpush1.bf16.msra.mxu0 %v1857
        %2017 = vmatprep.mubr.bf16.mxu0 %v1602
        %2018 = vmatmul.mubr.bf16.gmra.mrb[0].mxu0 %v1601
        %v2019 = vpop.f32.mrb[0].mxu0
        %v2020 = vadd.f32 %v1935, %v2019
        %v2021 = vpop.f32.mrb[0].mxu0
        %v2022 = vadd.f32 %v1939, %v2021
        %v2023 = vpop.f32.mrb[0].mxu0
        %v2024 = vpop.f32.mrb[0].mxu0
        %2025 = vdwg.mxu0
        %v2026 = vxor.u32 %v1979, 2147483648
        %v2027 = vmul.f32 %v2026, 1.442695
        %v2028 = vpow.pop %v2027
        %v2029 = vadd.f32 %v2028, 1.0
        %v2030 = vrcp.pop %v2029
        %v2031 = vmul.f32 1.0, %v2030
        %v2032 = vxor.u32 %v1981, 2147483648
        %v2033 = vmul.f32 %v2032, 1.442695
        %v2034 = vpow.pop %v2033
        %v2035 = vadd.f32 %v2034, 1.0
        %v2036 = vrcp.pop %v2035
        %v2037 = vmul.f32 1.0, %v2036
        %v2038 = vtanh.pop %v2020
        %v2039 = vxor.u32 %v2022, 2147483648
        %v2040 = vmul.f32 %v2039, 1.442695
        %v2041 = vpow.pop %v2040
        %v2042 = vadd.f32 %v2041, 1.0
        %v2043 = vrcp.pop %v2042
        %v2044 = vmul.f32 1.0, %v2043
        %v2045 = vmul.f32 %v2037, 0.0
        %v2046 = vmul.f32 %v2031, %v2038
        %v2047 = vadd.f32 %v2045, %v2046
        %v2048 = vtanh.pop %v2047
        %v2049 = vmul.f32 %v2044, %v2048
        %s2050 = scalar_lea.vmem [#allocation2], 1
        %v2051 = vld [vmem:[%s2050] ss:$2 sm:$0xf]
        %2052 = vmatprep.subr.bf16.mxu0 %v1395
        %2053 = vmatpush1.bf16.msra.mxu0 %v1394
        %2054 = vmatprep.subr.bf16.mxu0 %v1399
        %2055 = vmatpush1.bf16.msra.mxu0 %v1398
        %2056 = vmatprep.subr.bf16.mxu0 %v1403
        %2057 = vmatpush1.bf16.msra.mxu0 %v1402
        %2058 = vmatprep.subr.bf16.mxu0 %v1407
        %2059 = vmatpush1.bf16.msra.mxu0 %v1406
        %2060 = vmatprep.subr.bf16.mxu0 %v1411
        %2061 = vmatpush1.bf16.msra.mxu0 %v1410
        %2062 = vmatprep.subr.bf16.mxu0 %v1415
        %2063 = vmatpush1.bf16.msra.mxu0 %v1414
        %2064 = vmatprep.subr.bf16.mxu0 %v1419
        %2065 = vmatpush1.bf16.msra.mxu0 %v1418
        %2066 = vmatprep.subr.bf16.mxu0 %v1423
        %2067 = vmatpush1.bf16.msra.mxu0 %v1422
        %2068 = vmatprep.subr.bf16.mxu0 0
        %2069 = vmatpush1.bf16.msra.mxu0 0
        %2070 = vmatprep.subr.bf16.mxu0 0
        %2071 = vmatpush1.bf16.msra.mxu0 0
        %2072 = vmatprep.subr.bf16.mxu0 0
        %2073 = vmatpush1.bf16.msra.mxu0 0
        %2074 = vmatprep.subr.bf16.mxu0 0
        %2075 = vmatpush1.bf16.msra.mxu0 0
        %2076 = vmatprep.subr.bf16.mxu0 0
        %2077 = vmatpush1.bf16.msra.mxu0 0
        %2078 = vmatprep.subr.bf16.mxu0 0
        %2079 = vmatpush1.bf16.msra.mxu0 0
        %2080 = vmatprep.subr.bf16.mxu0 0
        %2081 = vmatpush1.bf16.msra.mxu0 0
        %2082 = vmatprep.subr.bf16.mxu0 0
        %2083 = vmatpush1.bf16.msra.mxu0 0
        %2084 = vmatprep.mubr.bf16.mxu0 0
        %2085 = vmatmul.mubr.bf16.gmra.mrb[0].mxu0 %v1601
        %v2086 = vpop.f32.mrb[0].mxu0
        %v2087 = vadd.f32 0.0, %v2086
        %v2088 = vpop.f32.mrb[0].mxu0
        %v2089 = vadd.f32 0.0, %v2088
        %v2090 = vpop.f32.mrb[0].mxu0
        %v2091 = vpop.f32.mrb[0].mxu0
        %2092 = vdwg.mxu0
        %2093 = vmatprep.subr.bf16.mxu0 %v1397
        %2094 = vmatpush1.bf16.msra.mxu0 %v1396
        %2095 = vmatprep.subr.bf16.mxu0 %v1401
        %2096 = vmatpush1.bf16.msra.mxu0 %v1400
        %2097 = vmatprep.subr.bf16.mxu0 %v1405
        %2098 = vmatpush1.bf16.msra.mxu0 %v1404
        %2099 = vmatprep.subr.bf16.mxu0 %v1409
        %2100 = vmatpush1.bf16.msra.mxu0 %v1408
        %2101 = vmatprep.subr.bf16.mxu0 %v1413
        %2102 = vmatpush1.bf16.msra.mxu0 %v1412
        %2103 = vmatprep.subr.bf16.mxu0 %v1417
        %2104 = vmatpush1.bf16.msra.mxu0 %v1416
        %2105 = vmatprep.subr.bf16.mxu0 %v1421
        %2106 = vmatpush1.bf16.msra.mxu0 %v1420
        %2107 = vmatprep.subr.bf16.mxu0 %v1425
        %2108 = vmatpush1.bf16.msra.mxu0 %v1424
        %2109 = vmatprep.subr.bf16.mxu0 0
        %2110 = vmatpush1.bf16.msra.mxu0 0
        %2111 = vmatprep.subr.bf16.mxu0 0
        %2112 = vmatpush1.bf16.msra.mxu0 0
        %2113 = vmatprep.subr.bf16.mxu0 0
        %2114 = vmatpush1.bf16.msra.mxu0 0
        %2115 = vmatprep.subr.bf16.mxu0 0
        %2116 = vmatpush1.bf16.msra.mxu0 0
        %2117 = vmatprep.subr.bf16.mxu0 0
        %2118 = vmatpush1.bf16.msra.mxu0 0
        %2119 = vmatprep.subr.bf16.mxu0 0
        %2120 = vmatpush1.bf16.msra.mxu0 0
        %2121 = vmatprep.subr.bf16.mxu0 0
        %2122 = vmatpush1.bf16.msra.mxu0 0
        %2123 = vmatprep.subr.bf16.mxu0 0
        %2124 = vmatpush1.bf16.msra.mxu0 0
        %2125 = vmatprep.mubr.bf16.mxu0 0
        %2126 = vmatmul.mubr.bf16.gmra.mrb[0].mxu0 %v1601
        %v2127 = vpop.f32.mrb[0].mxu0
        %v2128 = vadd.f32 0.0, %v2127
        %v2129 = vpop.f32.mrb[0].mxu0
        %v2130 = vadd.f32 0.0, %v2129
        %v2131 = vpop.f32.mrb[0].mxu0
        %v2132 = vpop.f32.mrb[0].mxu0
        %2133 = vdwg.mxu0
        %v2138 = vcombine.low %v2087, %v2089
        %v2139 = vcombine.low %v2128, %v2130
        %v2141 = vunpack.c.l.s4 1966171168
        %v2142 = vunpack.c.0.s8 %v2141
        %v2143 = vlaneseq
        %v2144 = vshrl.u32 %v2143, 7
        %v2145 = vsub.s32 %v2142, %v2144
        %v2146 = vrot.slane %v2138, %v2145
        %v2148 = vunpack.c.l.s4 1966171168
        %v2149 = vunpack.c.0.s8 %v2148
        %v2150 = vlaneseq
        %v2151 = vshrl.u32 %v2150, 7
        %v2152 = vsub.s32 %v2149, %v2151
        %v2153 = vrot.slane %v2139, %v2152
        %v2154 = vcombine.low %v2146, %v2153
        %v2156 = vunpack.c.l.s4 1966171168
        %v2157 = vunpack.c.0.s8 %v2156
        %v2158 = vlaneseq
        %v2159 = vshrl.u32 %v2158, 7
        %v2160 = vsub.s32 %v2157, %v2159
        %v2161 = vrot.slane %v2154, %v2160
        %v2163 = vadd.f32 %v2051, %v2161
        %v2164 = vxor.u32 %v2163, 2147483648
        %v2165 = vmul.f32 %v2164, 1.442695
        %v2166 = vpow.pop %v2165
        %v2167 = vadd.f32 %v2166, 1.0
        %v2168 = vrcp.pop %v2167
        %v2169 = vmul.f32 1.0, %v2168
        %v2171 = vrot.slane %v2163, 1
        %v2173 = vxor.u32 %v2171, 2147483648
        %v2174 = vmul.f32 %v2173, 1.442695
        %v2175 = vpow.pop %v2174
        %v2176 = vadd.f32 %v2175, 1.0
        %v2177 = vrcp.pop %v2176
        %v2178 = vmul.f32 1.0, %v2177
        %v2179 = vrot.slane %v2163, 2
        %v2181 = vtanh.pop %v2179
        %v2182 = vrot.slane %v2163, 3
        %v2184 = vxor.u32 %v2182, 2147483648
        %v2185 = vmul.f32 %v2184, 1.442695
        %v2186 = vpow.pop %v2185
        %v2187 = vadd.f32 %v2186, 1.0
        %v2188 = vrcp.pop %v2187
        %v2189 = vmul.f32 1.0, %v2188
        %v2190 = vmul.f32 %v2178, %v1598
        %v2191 = vmul.f32 %v2169, %v2181
        %v2192 = vadd.f32 %v2190, %v2191
        %v2193 = vtanh.pop %v2192
        %v2194 = vmul.f32 %v2189, %v2193
        %v2195 = vpack.c.bf16 %v2194, %v2194
        %v2196 = vpack.c.bf16 %v2049, %v2049
        %2197 = vmatprep.subr.bf16.mxu0 %v1796
        %2198 = vmatpush1.bf16.msra.mxu0 %v1795
        %2199 = vmatprep.subr.bf16.mxu0 %v1800
        %2200 = vmatpush1.bf16.msra.mxu0 %v1799
        %2201 = vmatprep.subr.bf16.mxu0 %v1804
        %2202 = vmatpush1.bf16.msra.mxu0 %v1803
        %2203 = vmatprep.subr.bf16.mxu0 %v1808
        %2204 = vmatpush1.bf16.msra.mxu0 %v1807
        %2205 = vmatprep.subr.bf16.mxu0 %v1812
        %2206 = vmatpush1.bf16.msra.mxu0 %v1811
        %2207 = vmatprep.subr.bf16.mxu0 %v1816
        %2208 = vmatpush1.bf16.msra.mxu0 %v1815
        %2209 = vmatprep.subr.bf16.mxu0 %v1820
        %2210 = vmatpush1.bf16.msra.mxu0 %v1819
        %2211 = vmatprep.subr.bf16.mxu0 %v1824
        %2212 = vmatpush1.bf16.msra.mxu0 %v1823
        %2213 = vmatprep.subr.bf16.mxu0 %v1828
        %2214 = vmatpush1.bf16.msra.mxu0 %v1827
        %2215 = vmatprep.subr.bf16.mxu0 %v1832
        %2216 = vmatpush1.bf16.msra.mxu0 %v1831
        %2217 = vmatprep.subr.bf16.mxu0 %v1836
        %2218 = vmatpush1.bf16.msra.mxu0 %v1835
        %2219 = vmatprep.subr.bf16.mxu0 %v1840
        %2220 = vmatpush1.bf16.msra.mxu0 %v1839
        %2221 = vmatprep.subr.bf16.mxu0 %v1844
        %2222 = vmatpush1.bf16.msra.mxu0 %v1843
        %2223 = vmatprep.subr.bf16.mxu0 %v1848
        %2224 = vmatpush1.bf16.msra.mxu0 %v1847
        %2225 = vmatprep.subr.bf16.mxu0 %v1852
        %2226 = vmatpush1.bf16.msra.mxu0 %v1851
        %2227 = vmatprep.subr.bf16.mxu0 %v1856
        %2228 = vmatpush1.bf16.msra.mxu0 %v1855
        %2229 = vmatprep.mubr.bf16.mxu0 %v2196
        %2230 = vmatmul.mubr.bf16.gmra.mrb[0].mxu0 %v2195
        %v2231 = vpop.f32.mrb[0].mxu0
        %v2232 = vadd.f32 %v1927, %v2231
        %v2233 = vpop.f32.mrb[0].mxu0
        %v2234 = vadd.f32 %v1931, %v2233
        %v2235 = vpop.f32.mrb[0].mxu0
        %v2236 = vpop.f32.mrb[0].mxu0
        %2237 = vdwg.mxu0
        %2238 = vmatprep.subr.bf16.mxu0 %v1798
        %2239 = vmatpush1.bf16.msra.mxu0 %v1797
        %2240 = vmatprep.subr.bf16.mxu0 %v1802
        %2241 = vmatpush1.bf16.msra.mxu0 %v1801
        %2242 = vmatprep.subr.bf16.mxu0 %v1806
        %2243 = vmatpush1.bf16.msra.mxu0 %v1805
        %2244 = vmatprep.subr.bf16.mxu0 %v1810
        %2245 = vmatpush1.bf16.msra.mxu0 %v1809
        %2246 = vmatprep.subr.bf16.mxu0 %v1814
        %2247 = vmatpush1.bf16.msra.mxu0 %v1813
        %2248 = vmatprep.subr.bf16.mxu0 %v1818
        %2249 = vmatpush1.bf16.msra.mxu0 %v1817
        %2250 = vmatprep.subr.bf16.mxu0 %v1822
        %2251 = vmatpush1.bf16.msra.mxu0 %v1821
        %2252 = vmatprep.subr.bf16.mxu0 %v1826
        %2253 = vmatpush1.bf16.msra.mxu0 %v1825
        %2254 = vmatprep.subr.bf16.mxu0 %v1830
        %2255 = vmatpush1.bf16.msra.mxu0 %v1829
        %2256 = vmatprep.subr.bf16.mxu0 %v1834
        %2257 = vmatpush1.bf16.msra.mxu0 %v1833
        %2258 = vmatprep.subr.bf16.mxu0 %v1838
        %2259 = vmatpush1.bf16.msra.mxu0 %v1837
        %2260 = vmatprep.subr.bf16.mxu0 %v1842
        %2261 = vmatpush1.bf16.msra.mxu0 %v1841
        %2262 = vmatprep.subr.bf16.mxu0 %v1846
        %2263 = vmatpush1.bf16.msra.mxu0 %v1845
        %2264 = vmatprep.subr.bf16.mxu0 %v1850
        %2265 = vmatpush1.bf16.msra.mxu0 %v1849
        %2266 = vmatprep.subr.bf16.mxu0 %v1854
        %2267 = vmatpush1.bf16.msra.mxu0 %v1853
        %2268 = vmatprep.subr.bf16.mxu0 %v1858
        %2269 = vmatpush1.bf16.msra.mxu0 %v1857
        %2270 = vmatprep.mubr.bf16.mxu0 %v2196
        %2271 = vmatmul.mubr.bf16.gmra.mrb[0].mxu0 %v2195
        %v2272 = vpop.f32.mrb[0].mxu0
        %v2273 = vadd.f32 %v1935, %v2272
        %v2274 = vpop.f32.mrb[0].mxu0
        %v2275 = vadd.f32 %v1939, %v2274
        %v2276 = vpop.f32.mrb[0].mxu0
        %v2277 = vpop.f32.mrb[0].mxu0
        %2278 = vdwg.mxu0
        %v2279 = vxor.u32 %v2232, 2147483648
        %v2280 = vmul.f32 %v2279, 1.442695
        %v2281 = vpow.pop %v2280
        %v2282 = vadd.f32 %v2281, 1.0
        %v2283 = vrcp.pop %v2282
        %v2284 = vmul.f32 1.0, %v2283
        %v2285 = vxor.u32 %v2234, 2147483648
        %v2286 = vmul.f32 %v2285, 1.442695
        %v2287 = vpow.pop %v2286
        %v2288 = vadd.f32 %v2287, 1.0
        %v2289 = vrcp.pop %v2288
        %v2290 = vmul.f32 1.0, %v2289
        %v2291 = vtanh.pop %v2273
        %v2292 = vxor.u32 %v2275, 2147483648
        %v2293 = vmul.f32 %v2292, 1.442695
        %v2294 = vpow.pop %v2293
        %v2295 = vadd.f32 %v2294, 1.0
        %v2296 = vrcp.pop %v2295
        %v2297 = vmul.f32 1.0, %v2296
        %v2298 = vmul.f32 %v2290, %v2047
        %v2299 = vmul.f32 %v2284, %v2291
        %v2300 = vadd.f32 %v2298, %v2299
        %v2301 = vtanh.pop %v2300
        %v2302 = vmul.f32 %v2297, %v2301
        %v2303 = vpack.c.bf16 %v2302, %v2302
        %v2304 = vld [vmem:[%s12] sm:$0xf]
        %v2305 = vld [vmem:[%s12 + $0x4] sm:$0xf]
        %v2306 = vld [vmem:[%s12 + $0x8] sm:$0xf]
        %v2307 = vld [vmem:[%s12 + $0xc] sm:$0xf]
        %v2308 = vld [vmem:[%s12 + $0x10] sm:$0xf]
        %v2309 = vld [vmem:[%s12 + $0x14] sm:$0xf]
        %v2310 = vld [vmem:[%s12 + $0x18] sm:$0xf]
        %v2311 = vld [vmem:[%s12 + $0x1c] sm:$0xf]
        %v2312 = vld [vmem:[%s12 + $0x20] sm:$0xf]
        %v2313 = vld [vmem:[%s12 + $0x24] sm:$0xf]
        %v2314 = vld [vmem:[%s12 + $0x28] sm:$0xf]
        %v2315 = vld [vmem:[%s12 + $0x2c] sm:$0xf]
        %v2316 = vld [vmem:[%s12 + $0x30] sm:$0xf]
        %v2317 = vld [vmem:[%s12 + $0x34] sm:$0xf]
        %v2318 = vld [vmem:[%s12 + $0x38] sm:$0xf]
        %v2319 = vld [vmem:[%s12 + $0x3c] sm:$0xf]
        %v2320 = vld [vmem:[%s13] sm:$0x1]
        %v2337 = vunpack.c.l.b16 %v2304
        %v2338 = vunpack.c.l.b16 %v2305
        %v2339 = vunpack.c.l.b16 %v2306
        %v2340 = vunpack.c.l.b16 %v2307
        %v2341 = vunpack.c.l.b16 %v2308
        %v2342 = vunpack.c.l.b16 %v2309
        %v2343 = vunpack.c.l.b16 %v2310
        %v2344 = vunpack.c.l.b16 %v2311
        %v2345 = vunpack.c.l.b16 %v2312
        %v2346 = vunpack.c.l.b16 %v2313
        %v2347 = vunpack.c.l.b16 %v2314
        %v2348 = vunpack.c.l.b16 %v2315
        %v2349 = vunpack.c.l.b16 %v2316
        %v2350 = vunpack.c.l.b16 %v2317
        %v2351 = vunpack.c.l.b16 %v2318
        %v2352 = vunpack.c.l.b16 %v2319
        %v2353 = vpack.c.b16 %v2338, %v2337
        %v2354 = vpack.c.b16 %v2340, %v2339
        %v2355 = vpack.c.b16 %v2342, %v2341
        %v2356 = vpack.c.b16 %v2344, %v2343
        %v2357 = vpack.c.b16 %v2346, %v2345
        %v2358 = vpack.c.b16 %v2348, %v2347
        %v2359 = vpack.c.b16 %v2350, %v2349
        %v2360 = vpack.c.b16 %v2352, %v2351
        %2369 = vmatprep.subr.bf16.mxu0 0
        %2370 = vmatpush1.bf16.msra.mxu0 %v2353
        %2371 = vmatprep.subr.bf16.mxu0 0
        %2372 = vmatpush1.bf16.msra.mxu0 %v2354
        %2373 = vmatprep.subr.bf16.mxu0 0
        %2374 = vmatpush1.bf16.msra.mxu0 %v2355
        %2375 = vmatprep.subr.bf16.mxu0 0
        %2376 = vmatpush1.bf16.msra.mxu0 %v2356
        %2377 = vmatprep.subr.bf16.mxu0 0
        %2378 = vmatpush1.bf16.msra.mxu0 %v2357
        %2379 = vmatprep.subr.bf16.mxu0 0
        %2380 = vmatpush1.bf16.msra.mxu0 %v2358
        %2381 = vmatprep.subr.bf16.mxu0 0
        %2382 = vmatpush1.bf16.msra.mxu0 %v2359
        %2383 = vmatprep.subr.bf16.mxu0 0
        %2384 = vmatpush1.bf16.msra.mxu0 %v2360
        %2385 = vmatprep.subr.bf16.mxu0 0
        %2386 = vmatpush1.bf16.msra.mxu0 0
        %2387 = vmatprep.subr.bf16.mxu0 0
        %2388 = vmatpush1.bf16.msra.mxu0 0
        %2389 = vmatprep.subr.bf16.mxu0 0
        %2390 = vmatpush1.bf16.msra.mxu0 0
        %2391 = vmatprep.subr.bf16.mxu0 0
        %2392 = vmatpush1.bf16.msra.mxu0 0
        %2393 = vmatprep.subr.bf16.mxu0 0
        %2394 = vmatpush1.bf16.msra.mxu0 0
        %2395 = vmatprep.subr.bf16.mxu0 0
        %2396 = vmatpush1.bf16.msra.mxu0 0
        %2397 = vmatprep.subr.bf16.mxu0 0
        %2398 = vmatpush1.bf16.msra.mxu0 0
        %2399 = vmatprep.subr.bf16.mxu0 0
        %2400 = vmatpush1.bf16.msra.mxu0 0
        %2401 = vmatprep.mubr.bf16.mxu0 0
        %2402 = vmatmul.mubr.bf16.gmra.mrb[0].mxu0 %v2303
        %v2403 = vpop.f32.mrb[0].mxu0
        %v2404 = vadd.f32 %v2320, %v2403
        %v2405 = vpop.f32.mrb[0].mxu0
        %v2406 = vpop.f32.mrb[0].mxu0
        %v2407 = vpop.f32.mrb[0].mxu0
        %2408 = vdwg.mxu0
        %2409 = vst [vmem:[%s518] sm:$0x1] %v2404
        %s2410 = sand.u32 %s338, 1
        %s2411 = scalar_lea.sflag [#allocation5], %s2410
        %s2412 = sand.u32 %s338, 1
        %s2413 = scalar_lea.vmem [#allocation11], %s2412
        // Predicated region
        $region93: #{tpu_custom_call.1} parent=75 // pred_check
          %p2414 = pneg %p348
        $region94: #{tpu_custom_call.1} parent=75 // pred_check_branch
          %2416 = sbr.rel (%p2414) target = $region96
        $region95: #{tpu_custom_call.1} parent=75 // pred_region
          %s2418 = ssub.s32 16, 16
          %2419 = vsyncadd %s2411, %s2418
          %s2420 = smul.addr %s31, 16
          %s2421 = scalar_lea.hbm %s14, %s2420
          %s2423 = sshll.u32 %s2413, 4
          %s2424 = int_to_ptr.vmem [resolvable:$true] %s2423
          %2426 = dma.vmem_to_hbm [thread:$0]  %s2424, 16, %s2421, %s2411
        $region96: #{tpu_custom_call.1} parent=75 // pred_fallthru
          _
      $region76: #{tpu_custom_call.1} parent=5 // pred_fallthru
        _
      %p2427 = scmp.le.s32.totalorder 2, %s26
      // Predicated region
      $region97: #{tpu_custom_call.1} parent=5 // pred_check
        %p2428 = pneg %p2427
      $region98: #{tpu_custom_call.1} parent=5 // pred_check_branch
        %2430 = sbr.rel (%p2428) target = $region100
      $region99: #{tpu_custom_call.1} parent=5 // pred_region
        %s2431 = ssub.s32 %s26, 2
        // Predicated region
        $region101: #{tpu_custom_call.1} parent=99 // pred_check
          %p2432 = pneg %p354
        $region102: #{tpu_custom_call.1} parent=99 // pred_check_branch
          %2434 = sbr.rel (%p2432) target = $region104
        $region103: #{tpu_custom_call.1} parent=99 // pred_region
          %s2435 = sand.u32 %s339, 1
          %s2436 = scalar_lea.sflag [#allocation5], %s2435
          %s2437 = sand.u32 %s339, 1
          %s2438 = scalar_lea.vmem [#allocation11], %s2437
          %2439 = dma.done %s2436, 16
        $region104: #{tpu_custom_call.1} parent=99 // pred_fallthru
          _
      $region100: #{tpu_custom_call.1} parent=5 // pred_fallthru
        _
    $region6: #{tpu_custom_call.1} parent=1 // loop_footer
      %s30 = sadd.s32 1, %s26
    $region7: #{tpu_custom_call.1} parent=1 // loop_footer_branch
      %25 = sbr.rel target = $region3
    $region8: #{tpu_custom_call.1} parent=1 // loop_exit
      _
    %2440 = vsyncpa [#allocation4], 1
    %s2441 = scalar_lea.sflag [#allocation4], 1
    %2442 = vsyncpa %s2441, 1
    %2443 = vsyncpa [#allocation7], 1
    %2444 = vsyncpa [#allocation10], 1
    %2445 = vsyncpa [#allocation5], 1
    %s2446 = scalar_lea.sflag [#allocation5], 1
    %2447 = vsyncpa %s2446, 1

</llo_original>
